<compile_context>
chip_gen: v7x
topology: tpu7x:2x2x1
jax: 0.10.0
libtpu: 0.0.40
codegen_flags: <defaults>
</compile_context>

<pallas_src>
import numpy as np
import jax
import jax.numpy as jnp
from jax.experimental import pallas as pl
from jax.experimental.pallas import tpu as pltpu

# ---------------- problem sizes (small, deterministic) ----------------
B, N_INST = 2, 2            # batch, instances per image
H, W = 16, 128              # spatial_out resolution
NUM_CLASSES = 80            # from bbox_head config
P_POINTS = 256              # flattened FCOS points (all levels, all images)
FOCAL_GAMMA, FOCAL_ALPHA = 2.0, 0.25
assert FOCAL_GAMMA == 2.0   # jnp.square below is only valid for gamma == 2
NEG_INF = -1e9

# lane-dense layout constants
assert P_POINTS % 128 == 0
PR = P_POINTS // 128                      # sublane rows for P-indexed planes
CLS_FLAT = P_POINTS * NUM_CLASSES         # 20480
CLS_PAD = (-CLS_FLAT) % 1024              # pad to a whole number of (8,128) vregs
CLS_ROWS = (CLS_FLAT + CLS_PAD) // 128    # 160


# =====================================================================
# Fused kernel: FCOS det-head losses + AnchorFreeAELoss per-instance hot path
# =====================================================================
def fcos_fused_kernel(inst_ref, box_ref, ctr_c_ref,            # SMEM scalar tables
                      ae_ref, xym_ref, imap_ref,                # VMEM (AE part)
                      cls_ref, clst_ref, bb_ref, bbt_ref,       # VMEM (det part)
                      cz_ref, czt_ref, pos_ref,
                      logit_ref, label_ref,                     # VMEM outputs
                      var_ref, det_ref):                        # SMEM outputs
    # ---------------- det head: sigmoid focal loss (flat, lane-dense) -------
    x = cls_ref[...]                                   # (CLS_ROWS, 128)
    t = clst_ref[...]
    xs = jnp.maximum(x, -30.0)                         # VPU clamp (exp guard)
    e = jnp.exp(-xs)                                   # EUP pass 1
    ls = -jnp.log1p(e)                                 # EUP pass 2: log_sigmoid(x)
    p = pl.reciprocal(1.0 + e, approx=True)            # sigmoid(x), cheap EUP
    ce_pos = -ls                                       # -log p
    ce_neg = xs - ls                                   # -log(1-p)
    focal = (t * FOCAL_ALPHA * jnp.square(1.0 - p) * ce_pos
             + (1.0 - t) * (1.0 - FOCAL_ALPHA) * jnp.square(p) * ce_neg)
    if CLS_PAD:                                        # trace-time branch
        ridx = jax.lax.broadcasted_iota(jnp.int32, x.shape, 0)
        lidx = jax.lax.broadcasted_iota(jnp.int32, x.shape, 1)
        focal = jnp.where(ridx * 128 + lidx < CLS_FLAT, focal, 0.0)
    cls_sum = jnp.sum(focal)

    # ---------------- det head: GIoU on (l,t,r,b), dense (4, PR, 128) -------
    pos = pos_ref[...]                                 # (PR, 128)
    bb = bb_ref[...]                                   # (4, PR, 128)
    bbt = bbt_ref[...]
    mins = jnp.minimum(bb, bbt)
    maxs = jnp.maximum(bb, bbt)
    area_p = (bb[0] + bb[2]) * (bb[1] + bb[3])
    area_g = (bbt[0] + bbt[2]) * (bbt[1] + bbt[3])
    inter = (mins[0] + mins[2]) * (mins[1] + mins[3])
    enclose = (maxs[0] + maxs[2]) * (maxs[1] + maxs[3])
    union = area_p + area_g - inter
    # exact division with eps-clamped denominators (tiny block; avoids NaN
    # poisoning giou_sum at degenerate / non-positive points)
    giou = inter / jnp.maximum(union, 1e-6) \
        - (enclose - union) / jnp.maximum(enclose, 1e-6)
    giou_sum = jnp.sum(pos * (1.0 - giou))

    # ---------------- det head: centerness BCE (dense (PR, 128)) ------------
    cz = cz_ref[...]
    czt = czt_ref[...]
    # czt*(-log_sig(cz)) + (1-czt)*(-log_sig(-cz)) == (1-czt)*cz - log_sig(cz)
    bce = (1.0 - czt) * cz - jax.nn.log_sigmoid(cz)
    ctr_sum = jnp.sum(pos * bce)

    det_ref[0] = cls_sum
    det_ref[1] = giou_sum
    det_ref[2] = ctr_sum
    det_ref[3] = jnp.sum(pos)

    # ---------------- AE loss hot path (all B*N_INST instances) -------------
    rows = jax.lax.broadcasted_iota(jnp.int32, (H, W), 0)   # hoisted
    cols = jax.lax.broadcasted_iota(jnp.int32, (H, W), 1)
    xym_x = xym_ref[0, :, :]
    xym_y = xym_ref[1, :, :]

    # pass 0: tanh + coord add once per image (reused across instances)
    sp_x, sp_y, sigma = [], [], []
    for b in range(B):
        sp_x.append(jnp.tanh(ae_ref[b, 0, :, :]) + xym_x)
        sp_y.append(jnp.tanh(ae_ref[b, 1, :, :]) + xym_y)
        sigma.append(ae_ref[b, 2, :, :])

    # pass 1: issue all independent first-stage reductions before any of their
    # scalar results is consumed (lets the scheduler hide XLU/EUP latency).
    masks, cnts, s_sums = {}, {}, {}
    for b in range(B):
        imap_b = imap_ref[b, :, :]
        for j in range(N_INST):
            maskf = (imap_b == inst_ref[b, j]).astype(jnp.float32)
            masks[(b, j)] = maskf
            cnts[(b, j)] = jnp.maximum(jnp.sum(maskf), 1.0)
            s_sums[(b, j)] = jnp.sum(sigma[b] * maskf)

    # pass 2: centered variance, exp-distance map, windowed stores
    for b in range(B):
        for j in range(N_INST):
            maskf = masks[(b, j)]
            cnt = cnts[(b, j)]
            s_mean = s_sums[(b, j)] / cnt
            diff = (sigma[b] - s_mean) * maskf
            var = jnp.sum(diff * diff) / cnt            # population variance
            s_exp = jnp.exp(s_mean)

            cx = ctr_c_ref[b, j, 0]
            cy = ctr_c_ref[b, j, 1]
            dist = jnp.exp(-((sp_x[b] - cx) ** 2 + (sp_y[b] - cy) ** 2) * s_exp)

            lt0 = box_ref[b, j, 0]
            lt1 = box_ref[b, j, 1]
            rb0 = box_ref[b, j, 2]
            rb1 = box_ref[b, j, 3]
            win = (rows >= lt0) & (rows < rb0) & (cols >= lt1) & (cols < rb1)

            # Pixels outside the expanded box get a huge negative logit and
            # label 0 so they sort last in the lovasz hinge and contribute
            # exactly zero, reproducing the PyTorch window-slicing semantics.
            logit_ref[b, j, :, :] = jnp.where(win, 2.0 * dist - 1.0, NEG_INF)
            label_ref[b, j, :, :] = jnp.where(win, maskf, 0.0)
            var_ref[b, j] = var


def fused_losses_call(inst_ids, boxes, centers, ae, xym, imap,
                      cls_logits_d, cls_targets_d, bbox_p, bbox_t,
                      ctr_p, ctr_t, pos_p):
    smem = pltpu.MemorySpace.SMEM
    vmem = pltpu.MemorySpace.VMEM
    return pl.pallas_call(
        fcos_fused_kernel,
        out_shape=(
            jax.ShapeDtypeStruct((B, N_INST, H, W), jnp.float32),   # logits
            jax.ShapeDtypeStruct((B, N_INST, H, W), jnp.float32),   # labels
            jax.ShapeDtypeStruct((B, N_INST), jnp.float32),         # vars
            jax.ShapeDtypeStruct((4,), jnp.float32),                # det sums
        ),
        in_specs=[
            pl.BlockSpec(memory_space=smem),     # inst_ids (B, N_INST) i32
            pl.BlockSpec(memory_space=smem),     # boxes    (B, N_INST, 4) i32
            pl.BlockSpec(memory_space=smem),     # centers  (B, N_INST, 2) f32
            pl.BlockSpec(memory_space=vmem),     # ae       (B, 3, H, W)
            pl.BlockSpec(memory_space=vmem),     # xym      (2, H, W)
            pl.BlockSpec(memory_space=vmem),     # imap     (B, H, W) i32
            pl.BlockSpec(memory_space=vmem),     # cls logits  (CLS_ROWS, 128)
            pl.BlockSpec(memory_space=vmem),     # cls targets (CLS_ROWS, 128)
            pl.BlockSpec(memory_space=vmem),     # bbox pred   (4, PR, 128)
            pl.BlockSpec(memory_space=vmem),     # bbox tgt    (4, PR, 128)
            pl.BlockSpec(memory_space=vmem),     # ctr pred    (PR, 128)
            pl.BlockSpec(memory_space=vmem),     # ctr tgt     (PR, 128)
            pl.BlockSpec(memory_space=vmem),     # pos mask    (PR, 128)
        ],
        out_specs=(
            pl.BlockSpec(memory_space=vmem),
            pl.BlockSpec(memory_space=vmem),
            pl.BlockSpec(memory_space=smem),
            pl.BlockSpec(memory_space=smem),
        ),
    )(inst_ids, boxes, centers, ae, xym, imap,
      cls_logits_d, cls_targets_d, bbox_p, bbox_t, ctr_p, ctr_t, pos_p)


# =====================================================================
# lovasz hinge: global sort has no clean Pallas TPU equivalent -> plain JAX.
# TODO(synk): a window-bounded sort (static upper bound on the expanded-box
# area) would cut the argsort cost, but the expanded window size is
# data-dependent and jit needs static shapes; kept full-plane + NEG_INF pad.
# =====================================================================
def lovasz_hinge_flat(logits, labels):
    signs = 2.0 * labels - 1.0
    errors = 1.0 - logits * signs
    order = jnp.argsort(-errors)              # descending
    errors_sorted = errors[order]
    gt_sorted = labels[order]
    gts = jnp.sum(gt_sorted)
    inter = gts - jnp.cumsum(gt_sorted)
    union = gts + jnp.cumsum(1.0 - gt_sorted)
    jaccard = 1.0 - inter / union
    grad = jnp.concatenate([jaccard[:1], jaccard[1:] - jaccard[:-1]])
    return jnp.sum(jax.nn.relu(errors_sorted) * grad)


# =====================================================================
# FCOSLoss.forward equivalent
# TODO(synk): generate_fcos_annotations / mmdet FCOSHead.loss target assignment
# is external code; synthetic flattened point targets are built in-script.
# =====================================================================
@jax.jit
def fcos_loss_forward(spatial_out, det_inputs, ae_inputs):
    (cls_logits, cls_targets, bbox_pred, bbox_targets,
     ctr_pred, ctr_targets, pos_mask) = det_inputs
    inst_ids, boxes, centers, xym, imap = ae_inputs

    # lane-dense layouts for the det head (done once in the XLA wrapper)
    def _flat_dense(a):
        f = a.reshape(-1)
        if CLS_PAD:
            f = jnp.pad(f, (0, CLS_PAD))
        return f.reshape(CLS_ROWS, 128)

    cls_logits_d = _flat_dense(cls_logits)
    cls_targets_d = _flat_dense(cls_targets)
    bbox_p = bbox_pred.T.reshape(4, PR, 128)
    bbox_t = bbox_targets.T.reshape(4, PR, 128)
    ctr_p = ctr_pred.reshape(PR, 128)
    ctr_t = ctr_targets.reshape(PR, 128)
    pos_p = pos_mask.reshape(PR, 128)

    logits, labels, vars_, det_sums = fused_losses_call(
        inst_ids, boxes, centers, spatial_out, xym, imap,
        cls_logits_d, cls_targets_d, bbox_p, bbox_t, ctr_p, ctr_t, pos_p)

    num_pos = jnp.maximum(det_sums[3], 1.0)
    cls_loss = det_sums[0] / num_pos
    wh_loss = det_sums[1] / num_pos
    center_loss = det_sums[2] / num_pos

    inst_losses = jax.vmap(lovasz_hinge_flat)(
        logits.reshape(B * N_INST, H * W),
        labels.reshape(B * N_INST, H * W)).reshape(B, N_INST)
    per_batch = (jnp.sum(vars_, axis=1)
                 + jnp.sum(inst_losses, axis=1)) / max(N_INST, 1)
    ae = jnp.mean(per_batch)      # (var_loss + instance_loss)/n, averaged over b

    total_loss = cls_loss + wh_loss + center_loss + ae
    losses = {"cls_loss": cls_loss, "wh_loss": wh_loss,
              "center_loss": center_loss, "ae_loss": ae,
              "total_loss": total_loss}
    return total_loss, losses


# ---------------- deterministic synthetic inputs ----------------
def build_instance_data():
    imap = np.zeros((B, H, W), np.int32)
    rects = {(0, 0): (2, 10, 8, 40), (0, 1): (9, 60, 14, 100),
             (1, 0): (1, 5, 6, 50), (1, 1): (8, 70, 15, 120)}
    inst_ids = np.zeros((B, N_INST), np.int32)
    boxes = np.zeros((B, N_INST, 4), np.int32)     # expanded (lt0, lt1, rb0, rb1)
    tight = np.zeros((B, N_INST, 4), np.int32)
    for (b, j), (r0, c0, r1, c1) in rects.items():
        iid = j + 1
        imap[b, r0:r1, c0:c1] = iid
        inst_ids[b, j] = iid
        tight[b, j] = [r0, c0, r1, c1]
        # TODO(synk): convert_corner_to_corner source unavailable; 1.5x expansion
        # around the box center with clipping to the image is used.
        ctr = np.array([(r0 + r1) / 2.0, (c0 + c1) / 2.0])
        half = np.array([(r1 - r0) / 2.0, (c1 - c0) / 2.0]) * 1.5
        lt = np.maximum(np.floor(ctr - half), 0).astype(np.int32)
        rb = np.minimum(np.ceil(ctr + half), [H, W]).astype(np.int32)
        boxes[b, j] = [lt[0], lt[1], rb[0], rb[1]]

    # TODO(synk): generate_coordinates source unavailable; normalized coord grid.
    ys, xs = np.meshgrid(np.arange(H), np.arange(W), indexing="ij")
    xym = np.stack([xs / float(W), ys / float(H)]).astype(np.float32)  # (2,H,W)

    centers = np.zeros((B, N_INST, 2), np.float32)
    for b in range(B):
        for j in range(N_INST):
            r0, c0, r1, c1 = tight[b, j]
            ci, cj = (r0 + r1) // 2, (c0 + c1) // 2
            centers[b, j] = xym[:, ci, cj]
    return (jnp.asarray(imap), jnp.asarray(inst_ids),
            jnp.asarray(boxes), jnp.asarray(xym), jnp.asarray(centers))


if __name__ == "__main__":
    key = jax.random.PRNGKey(0)
    k = jax.random.split(key, 8)

    # spatial_out (the "ae" map): B x 3 x H x W  (2 embedding channels + sigma)
    spatial_out = jax.random.normal(k[0], (B, 3, H, W), jnp.float32)
    imap, inst_ids, boxes, xym, centers = build_instance_data()
    ae_inputs = (inst_ids, boxes, centers, xym, imap)

    # synthetic flattened FCOS head outputs + targets
    cls_logits = jax.random.normal(k[1], (P_POINTS, NUM_CLASSES), jnp.float32)
    labels = jax.random.randint(k[2], (P_POINTS,), 0, NUM_CLASSES + 1)
    cls_targets = jax.nn.one_hot(labels, NUM_CLASSES, dtype=jnp.float32)
    pos_mask = (labels < NUM_CLASSES).astype(jnp.float32)[:, None]
    bbox_pred = jnp.abs(jax.random.normal(k[3], (P_POINTS, 4))) + 0.1
    bbox_targets = jnp.abs(jax.random.normal(k[4], (P_POINTS, 4))) + 0.1
    ctr_pred = jax.random.normal(k[5], (P_POINTS, 1), jnp.float32)
    ctr_targets = jax.random.uniform(k[6], (P_POINTS, 1), jnp.float32)
    det_inputs = (cls_logits, cls_targets, bbox_pred, bbox_targets,
                  ctr_pred, ctr_targets, pos_mask)

    total_loss, loss_dict = fcos_loss_forward(spatial_out, det_inputs, ae_inputs)
    total_loss = jax.block_until_ready(total_loss)
    jax.block_until_ready(loss_dict)
    assert np.isfinite(float(total_loss))
    print("KERNEL_OK")
</pallas_src>

<mosaic_0001>
module attributes {stable_mosaic.version = 11 : i64} {
  func.func private @main(%arg0: i32) attributes {dimension_semantics = [#tpu.dimension_semantics<core_parallel>], iteration_bounds = array<i64: 2>, tpu.core_type = #tpu.core_type<sc_scalar_subcore>, window_params = []} {
    return
  }
}

module attributes {stable_mosaic.version = 11 : i64} {
  func.func private @main(%arg0: i32) attributes {dimension_semantics = [#tpu.dimension_semantics<core_parallel>], iteration_bounds = array<i64: 2>, tpu.core_type = #tpu.core_type<sc_scalar_subcore>, window_params = []} {
    return
  }
}

module attributes {stable_mosaic.version = 11 : i64} {
  func.func @fcos_fused_kernel(%arg0: memref<2x2xi32, #tpu.memory_space<smem>>, %arg1: memref<2x2x4xi32, #tpu.memory_space<smem>>, %arg2: memref<2x2x2xf32, #tpu.memory_space<smem>>, %arg3: memref<2x3x16x128xf32, #tpu.memory_space<vmem>>, %arg4: memref<2x16x128xf32, #tpu.memory_space<vmem>>, %arg5: memref<2x16x128xi32, #tpu.memory_space<vmem>>, %arg6: memref<160x128xf32, #tpu.memory_space<vmem>>, %arg7: memref<160x128xf32, #tpu.memory_space<vmem>>, %arg8: memref<4x2x128xf32, #tpu.memory_space<vmem>>, %arg9: memref<4x2x128xf32, #tpu.memory_space<vmem>>, %arg10: memref<2x128xf32, #tpu.memory_space<vmem>>, %arg11: memref<2x128xf32, #tpu.memory_space<vmem>>, %arg12: memref<2x128xf32, #tpu.memory_space<vmem>>, %arg13: memref<2x2x16x128xf32, #tpu.memory_space<vmem>>, %arg14: memref<2x2x16x128xf32, #tpu.memory_space<vmem>>, %arg15: memref<2x2xf32, #tpu.memory_space<smem>>, %arg16: memref<4xf32, #tpu.memory_space<smem>>) attributes {dimension_semantics = [], scalar_prefetch = 0 : i64, scratch_operands = 0 : i64, tpu.core_type = #tpu.core_type<tc>} {
    %c0 = arith.constant 0 : index
    %c0_0 = arith.constant 0 : index
    %0 = vector.load %arg6[%c0, %c0_0] : memref<160x128xf32, #tpu.memory_space<vmem>>, vector<160x128xf32>
    %c0_1 = arith.constant 0 : index
    %c0_2 = arith.constant 0 : index
    %1 = vector.load %arg7[%c0_1, %c0_2] : memref<160x128xf32, #tpu.memory_space<vmem>>, vector<160x128xf32>
    %cst = arith.constant -3.000000e+01 : f32
    %2 = vector.broadcast %cst : f32 to vector<160x128xf32>
    %3 = arith.maximumf %0, %2 : vector<160x128xf32>
    %cst_3 = arith.constant 0.000000e+00 : f32
    %4 = vector.broadcast %cst_3 : f32 to vector<160x128xf32>
    %5 = arith.subf %4, %3 : vector<160x128xf32>
    %6 = math.exp %5 : vector<160x128xf32>
    %7 = math.log1p %6 : vector<160x128xf32>
    %cst_4 = arith.constant 0.000000e+00 : f32
    %8 = vector.broadcast %cst_4 : f32 to vector<160x128xf32>
    %9 = arith.subf %8, %7 : vector<160x128xf32>
    %cst_5 = arith.constant 1.000000e+00 : f32
    %10 = vector.broadcast %cst_5 : f32 to vector<160x128xf32>
    %11 = arith.addf %10, %6 : vector<160x128xf32>
    %12 = tpu.reciprocal %11 {approx = true} : vector<160x128xf32> -> vector<160x128xf32>
    %cst_6 = arith.constant 0.000000e+00 : f32
    %13 = vector.broadcast %cst_6 : f32 to vector<160x128xf32>
    %14 = arith.subf %13, %9 : vector<160x128xf32>
    %15 = arith.subf %3, %9 : vector<160x128xf32>
    %cst_7 = arith.constant 2.500000e-01 : f32
    %16 = vector.broadcast %cst_7 : f32 to vector<160x128xf32>
    %17 = arith.mulf %1, %16 : vector<160x128xf32>
    %cst_8 = arith.constant 1.000000e+00 : f32
    %18 = vector.broadcast %cst_8 : f32 to vector<160x128xf32>
    %19 = arith.subf %18, %12 : vector<160x128xf32>
    %20 = arith.mulf %19, %19 : vector<160x128xf32>
    %21 = arith.mulf %17, %20 : vector<160x128xf32>
    %22 = arith.mulf %21, %14 : vector<160x128xf32>
    %cst_9 = arith.constant 1.000000e+00 : f32
    %23 = vector.broadcast %cst_9 : f32 to vector<160x128xf32>
    %24 = arith.subf %23, %1 : vector<160x128xf32>
    %cst_10 = arith.constant 7.500000e-01 : f32
    %25 = vector.broadcast %cst_10 : f32 to vector<160x128xf32>
    %26 = arith.mulf %24, %25 : vector<160x128xf32>
    %27 = arith.mulf %12, %12 : vector<160x128xf32>
    %28 = arith.mulf %26, %27 : vector<160x128xf32>
    %29 = arith.mulf %28, %15 : vector<160x128xf32>
    %30 = arith.addf %22, %29 : vector<160x128xf32>
    %31 = vector.shape_cast %30 : vector<160x128xf32> to vector<1x160x128xf32>
    %cst_11 = arith.constant dense<0.000000e+00> : vector<1xf32>
    %32 = vector.multi_reduction <add>, %31, %cst_11 [1, 2] : vector<1x160x128xf32> to vector<1xf32>
    %33 = vector.shape_cast %32 : vector<1xf32> to vector<1x1x1xf32>
    %34 = vector.extract %33[0, 0, 0] : f32 from vector<1x1x1xf32>
    %c0_12 = arith.constant 0 : index
    %c0_13 = arith.constant 0 : index
    %35 = vector.load %arg12[%c0_12, %c0_13] : memref<2x128xf32, #tpu.memory_space<vmem>>, vector<2x128xf32>
    %c0_14 = arith.constant 0 : index
    %c0_15 = arith.constant 0 : index
    %c0_16 = arith.constant 0 : index
    %36 = vector.load %arg8[%c0_14, %c0_15, %c0_16] : memref<4x2x128xf32, #tpu.memory_space<vmem>>, vector<4x2x128xf32>
    %c0_17 = arith.constant 0 : index
    %c0_18 = arith.constant 0 : index
    %c0_19 = arith.constant 0 : index
    %37 = vector.load %arg9[%c0_17, %c0_18, %c0_19] : memref<4x2x128xf32, #tpu.memory_space<vmem>>, vector<4x2x128xf32>
    %38 = arith.minimumf %36, %37 : vector<4x2x128xf32>
    %39 = arith.maximumf %36, %37 : vector<4x2x128xf32>
    %40 = vector.extract_strided_slice %36 {offsets = [0, 0, 0], sizes = [1, 2, 128], strides = [1, 1, 1]} : vector<4x2x128xf32> to vector<1x2x128xf32>
    %41 = vector.shape_cast %40 : vector<1x2x128xf32> to vector<2x128xf32>
    %42 = vector.extract_strided_slice %36 {offsets = [2, 0, 0], sizes = [1, 2, 128], strides = [1, 1, 1]} : vector<4x2x128xf32> to vector<1x2x128xf32>
    %43 = vector.shape_cast %42 : vector<1x2x128xf32> to vector<2x128xf32>
    %44 = arith.addf %41, %43 : vector<2x128xf32>
    %45 = vector.extract_strided_slice %36 {offsets = [1, 0, 0], sizes = [1, 2, 128], strides = [1, 1, 1]} : vector<4x2x128xf32> to vector<1x2x128xf32>
    %46 = vector.shape_cast %45 : vector<1x2x128xf32> to vector<2x128xf32>
    %47 = vector.extract_strided_slice %36 {offsets = [3, 0, 0], sizes = [1, 2, 128], strides = [1, 1, 1]} : vector<4x2x128xf32> to vector<1x2x128xf32>
    %48 = vector.shape_cast %47 : vector<1x2x128xf32> to vector<2x128xf32>
    %49 = arith.addf %46, %48 : vector<2x128xf32>
    %50 = arith.mulf %44, %49 : vector<2x128xf32>
    %51 = vector.extract_strided_slice %37 {offsets = [0, 0, 0], sizes = [1, 2, 128], strides = [1, 1, 1]} : vector<4x2x128xf32> to vector<1x2x128xf32>
    %52 = vector.shape_cast %51 : vector<1x2x128xf32> to vector<2x128xf32>
    %53 = vector.extract_strided_slice %37 {offsets = [2, 0, 0], sizes = [1, 2, 128], strides = [1, 1, 1]} : vector<4x2x128xf32> to vector<1x2x128xf32>
    %54 = vector.shape_cast %53 : vector<1x2x128xf32> to vector<2x128xf32>
    %55 = arith.addf %52, %54 : vector<2x128xf32>
    %56 = vector.extract_strided_slice %37 {offsets = [1, 0, 0], sizes = [1, 2, 128], strides = [1, 1, 1]} : vector<4x2x128xf32> to vector<1x2x128xf32>
    %57 = vector.shape_cast %56 : vector<1x2x128xf32> to vector<2x128xf32>
    %58 = vector.extract_strided_slice %37 {offsets = [3, 0, 0], sizes = [1, 2, 128], strides = [1, 1, 1]} : vector<4x2x128xf32> to vector<1x2x128xf32>
    %59 = vector.shape_cast %58 : vector<1x2x128xf32> to vector<2x128xf32>
    %60 = arith.addf %57, %59 : vector<2x128xf32>
    %61 = arith.mulf %55, %60 : vector<2x128xf32>
    %62 = vector.extract_strided_slice %38 {offsets = [0, 0, 0], sizes = [1, 2, 128], strides = [1, 1, 1]} : vector<4x2x128xf32> to vector<1x2x128xf32>
    %63 = vector.shape_cast %62 : vector<1x2x128xf32> to vector<2x128xf32>
    %64 = vector.extract_strided_slice %38 {offsets = [2, 0, 0], sizes = [1, 2, 128], strides = [1, 1, 1]} : vector<4x2x128xf32> to vector<1x2x128xf32>
    %65 = vector.shape_cast %64 : vector<1x2x128xf32> to vector<2x128xf32>
    %66 = arith.addf %63, %65 : vector<2x128xf32>
    %67 = vector.extract_strided_slice %38 {offsets = [1, 0, 0], sizes = [1, 2, 128], strides = [1, 1, 1]} : vector<4x2x128xf32> to vector<1x2x128xf32>
    %68 = vector.shape_cast %67 : vector<1x2x128xf32> to vector<2x128xf32>
    %69 = vector.extract_strided_slice %38 {offsets = [3, 0, 0], sizes = [1, 2, 128], strides = [1, 1, 1]} : vector<4x2x128xf32> to vector<1x2x128xf32>
    %70 = vector.shape_cast %69 : vector<1x2x128xf32> to vector<2x128xf32>
    %71 = arith.addf %68, %70 : vector<2x128xf32>
    %72 = arith.mulf %66, %71 : vector<2x128xf32>
    %73 = vector.extract_strided_slice %39 {offsets = [0, 0, 0], sizes = [1, 2, 128], strides = [1, 1, 1]} : vector<4x2x128xf32> to vector<1x2x128xf32>
    %74 = vector.shape_cast %73 : vector<1x2x128xf32> to vector<2x128xf32>
    %75 = vector.extract_strided_slice %39 {offsets = [2, 0, 0], sizes = [1, 2, 128], strides = [1, 1, 1]} : vector<4x2x128xf32> to vector<1x2x128xf32>
    %76 = vector.shape_cast %75 : vector<1x2x128xf32> to vector<2x128xf32>
    %77 = arith.addf %74, %76 : vector<2x128xf32>
    %78 = vector.extract_strided_slice %39 {offsets = [1, 0, 0], sizes = [1, 2, 128], strides = [1, 1, 1]} : vector<4x2x128xf32> to vector<1x2x128xf32>
    %79 = vector.shape_cast %78 : vector<1x2x128xf32> to vector<2x128xf32>
    %80 = vector.extract_strided_slice %39 {offsets = [3, 0, 0], sizes = [1, 2, 128], strides = [1, 1, 1]} : vector<4x2x128xf32> to vector<1x2x128xf32>
    %81 = vector.shape_cast %80 : vector<1x2x128xf32> to vector<2x128xf32>
    %82 = arith.addf %79, %81 : vector<2x128xf32>
    %83 = arith.mulf %77, %82 : vector<2x128xf32>
    %84 = arith.addf %50, %61 : vector<2x128xf32>
    %85 = arith.subf %84, %72 : vector<2x128xf32>
    %cst_20 = arith.constant 9.99999997E-7 : f32
    %86 = vector.broadcast %cst_20 : f32 to vector<2x128xf32>
    %87 = arith.maximumf %85, %86 : vector<2x128xf32>
    %88 = arith.divf %72, %87 : vector<2x128xf32>
    %89 = arith.subf %83, %85 : vector<2x128xf32>
    %cst_21 = arith.constant 9.99999997E-7 : f32
    %90 = vector.broadcast %cst_21 : f32 to vector<2x128xf32>
    %91 = arith.maximumf %83, %90 : vector<2x128xf32>
    %92 = arith.divf %89, %91 : vector<2x128xf32>
    %93 = arith.subf %88, %92 : vector<2x128xf32>
    %cst_22 = arith.constant 1.000000e+00 : f32
    %94 = vector.broadcast %cst_22 : f32 to vector<2x128xf32>
    %95 = arith.subf %94, %93 : vector<2x128xf32>
    %96 = arith.mulf %35, %95 : vector<2x128xf32>
    %97 = vector.shape_cast %96 : vector<2x128xf32> to vector<1x2x128xf32>
    %cst_23 = arith.constant dense<0.000000e+00> : vector<1xf32>
    %98 = vector.multi_reduction <add>, %97, %cst_23 [1, 2] : vector<1x2x128xf32> to vector<1xf32>
    %99 = vector.shape_cast %98 : vector<1xf32> to vector<1x1x1xf32>
    %100 = vector.extract %99[0, 0, 0] : f32 from vector<1x1x1xf32>
    %c0_24 = arith.constant 0 : index
    %c0_25 = arith.constant 0 : index
    %101 = vector.load %arg10[%c0_24, %c0_25] : memref<2x128xf32, #tpu.memory_space<vmem>>, vector<2x128xf32>
    %c0_26 = arith.constant 0 : index
    %c0_27 = arith.constant 0 : index
    %102 = vector.load %arg11[%c0_26, %c0_27] : memref<2x128xf32, #tpu.memory_space<vmem>>, vector<2x128xf32>
    %cst_28 = arith.constant 1.000000e+00 : f32
    %103 = vector.broadcast %cst_28 : f32 to vector<2x128xf32>
    %104 = arith.subf %103, %102 : vector<2x128xf32>
    %105 = arith.mulf %104, %101 : vector<2x128xf32>
    %cst_29 = arith.constant 0.000000e+00 : f32
    %106 = vector.broadcast %cst_29 : f32 to vector<2x128xf32>
    %107 = arith.subf %106, %101 : vector<2x128xf32>
    %cst_30 = arith.constant 0.000000e+00 : f32
    %108 = vector.broadcast %cst_30 : f32 to vector<2x128xf32>
    %109 = arith.maximumf %107, %108 : vector<2x128xf32>
    %110 = vector.broadcast %cst_30 : f32 to vector<2x128xf32>
    %111 = arith.subf %107, %110 : vector<2x128xf32>
    %112 = arith.cmpf one, %111, %111 : vector<2x128xf32>
    %113 = vector.broadcast %cst_30 : f32 to vector<2x128xf32>
    %114 = arith.addf %107, %113 : vector<2x128xf32>
    %115 = math.absf %111 : vector<2x128xf32>
    %cst_31 = arith.constant 0.000000e+00 : f32
    %116 = vector.broadcast %cst_31 : f32 to vector<2x128xf32>
    %117 = arith.subf %116, %115 : vector<2x128xf32>
    %118 = math.exp %117 : vector<2x128xf32>
    %119 = math.log1p %118 : vector<2x128xf32>
    %120 = arith.addf %109, %119 : vector<2x128xf32>
    %121 = arith.select %112, %114, %120 : vector<2x128xi1>, vector<2x128xf32>
    %cst_32 = arith.constant 0.000000e+00 : f32
    %122 = vector.broadcast %cst_32 : f32 to vector<2x128xf32>
    %123 = arith.subf %122, %121 : vector<2x128xf32>
    %124 = arith.subf %105, %123 : vector<2x128xf32>
    %125 = arith.mulf %35, %124 : vector<2x128xf32>
    %126 = vector.shape_cast %125 : vector<2x128xf32> to vector<1x2x128xf32>
    %cst_33 = arith.constant dense<0.000000e+00> : vector<1xf32>
    %127 = vector.multi_reduction <add>, %126, %cst_33 [1, 2] : vector<1x2x128xf32> to vector<1xf32>
    %128 = vector.shape_cast %127 : vector<1xf32> to vector<1x1x1xf32>
    %129 = vector.extract %128[0, 0, 0] : f32 from vector<1x1x1xf32>
    %c0_34 = arith.constant 0 : index
    %130 = memref.load %arg16[%c0_34] : memref<4xf32, #tpu.memory_space<smem>>
    memref.store %34, %arg16[%c0_34] : memref<4xf32, #tpu.memory_space<smem>>
    %c1 = arith.constant 1 : index
    %131 = memref.load %arg16[%c1] : memref<4xf32, #tpu.memory_space<smem>>
    memref.store %100, %arg16[%c1] : memref<4xf32, #tpu.memory_space<smem>>
    %c2 = arith.constant 2 : index
    %132 = memref.load %arg16[%c2] : memref<4xf32, #tpu.memory_space<smem>>
    memref.store %129, %arg16[%c2] : memref<4xf32, #tpu.memory_space<smem>>
    %133 = vector.shape_cast %35 : vector<2x128xf32> to vector<1x2x128xf32>
    %cst_35 = arith.constant dense<0.000000e+00> : vector<1xf32>
    %134 = vector.multi_reduction <add>, %133, %cst_35 [1, 2] : vector<1x2x128xf32> to vector<1xf32>
    %135 = vector.shape_cast %134 : vector<1xf32> to vector<1x1x1xf32>
    %136 = vector.extract %135[0, 0, 0] : f32 from vector<1x1x1xf32>
    %c3 = arith.constant 3 : index
    %137 = memref.load %arg16[%c3] : memref<4xf32, #tpu.memory_space<smem>>
    memref.store %136, %arg16[%c3] : memref<4xf32, #tpu.memory_space<smem>>
    %138 = tpu.iota {dimensions = array<i32: 0>} : vector<16x128xi32>
    %139 = tpu.iota {dimensions = array<i32: 1>} : vector<16x128xi32>
    %c0_36 = arith.constant 0 : index
    %c0_37 = arith.constant 0 : index
    %c0_38 = arith.constant 0 : index
    %140 = vector.load %arg4[%c0_36, %c0_37, %c0_38] : memref<2x16x128xf32, #tpu.memory_space<vmem>>, vector<1x16x128xf32>
    %141 = vector.shape_cast %140 : vector<1x16x128xf32> to vector<16x128xf32>
    %c1_39 = arith.constant 1 : index
    %c0_40 = arith.constant 0 : index
    %c0_41 = arith.constant 0 : index
    %142 = vector.load %arg4[%c1_39, %c0_40, %c0_41] : memref<2x16x128xf32, #tpu.memory_space<vmem>>, vector<1x16x128xf32>
    %143 = vector.shape_cast %142 : vector<1x16x128xf32> to vector<16x128xf32>
    %c0_42 = arith.constant 0 : index
    %c0_43 = arith.constant 0 : index
    %c0_44 = arith.constant 0 : index
    %c0_45 = arith.constant 0 : index
    %144 = vector.load %arg3[%c0_42, %c0_43, %c0_44, %c0_45] : memref<2x3x16x128xf32, #tpu.memory_space<vmem>>, vector<1x1x16x128xf32>
    %145 = vector.shape_cast %144 : vector<1x1x16x128xf32> to vector<16x128xf32>
    %146 = math.tanh %145 : vector<16x128xf32>
    %147 = arith.addf %146, %141 : vector<16x128xf32>
    %c0_46 = arith.constant 0 : index
    %c1_47 = arith.constant 1 : index
    %c0_48 = arith.constant 0 : index
    %c0_49 = arith.constant 0 : index
    %148 = vector.load %arg3[%c0_46, %c1_47, %c0_48, %c0_49] : memref<2x3x16x128xf32, #tpu.memory_space<vmem>>, vector<1x1x16x128xf32>
    %149 = vector.shape_cast %148 : vector<1x1x16x128xf32> to vector<16x128xf32>
    %150 = math.tanh %149 : vector<16x128xf32>
    %151 = arith.addf %150, %143 : vector<16x128xf32>
    %c0_50 = arith.constant 0 : index
    %c2_51 = arith.constant 2 : index
    %c0_52 = arith.constant 0 : index
    %c0_53 = arith.constant 0 : index
    %152 = vector.load %arg3[%c0_50, %c2_51, %c0_52, %c0_53] : memref<2x3x16x128xf32, #tpu.memory_space<vmem>>, vector<1x1x16x128xf32>
    %153 = vector.shape_cast %152 : vector<1x1x16x128xf32> to vector<16x128xf32>
    %c1_54 = arith.constant 1 : index
    %c0_55 = arith.constant 0 : index
    %c0_56 = arith.constant 0 : index
    %c0_57 = arith.constant 0 : index
    %154 = vector.load %arg3[%c1_54, %c0_55, %c0_56, %c0_57] : memref<2x3x16x128xf32, #tpu.memory_space<vmem>>, vector<1x1x16x128xf32>
    %155 = vector.shape_cast %154 : vector<1x1x16x128xf32> to vector<16x128xf32>
    %156 = math.tanh %155 : vector<16x128xf32>
    %157 = arith.addf %156, %141 : vector<16x128xf32>
    %c1_58 = arith.constant 1 : index
    %c1_59 = arith.constant 1 : index
    %c0_60 = arith.constant 0 : index
    %c0_61 = arith.constant 0 : index
    %158 = vector.load %arg3[%c1_58, %c1_59, %c0_60, %c0_61] : memref<2x3x16x128xf32, #tpu.memory_space<vmem>>, vector<1x1x16x128xf32>
    %159 = vector.shape_cast %158 : vector<1x1x16x128xf32> to vector<16x128xf32>
    %160 = math.tanh %159 : vector<16x128xf32>
    %161 = arith.addf %160, %143 : vector<16x128xf32>
    %c1_62 = arith.constant 1 : index
    %c2_63 = arith.constant 2 : index
    %c0_64 = arith.constant 0 : index
    %c0_65 = arith.constant 0 : index
    %162 = vector.load %arg3[%c1_62, %c2_63, %c0_64, %c0_65] : memref<2x3x16x128xf32, #tpu.memory_space<vmem>>, vector<1x1x16x128xf32>
    %163 = vector.shape_cast %162 : vector<1x1x16x128xf32> to vector<16x128xf32>
    %c0_66 = arith.constant 0 : index
    %c0_67 = arith.constant 0 : index
    %c0_68 = arith.constant 0 : index
    %164 = vector.load %arg5[%c0_66, %c0_67, %c0_68] : memref<2x16x128xi32, #tpu.memory_space<vmem>>, vector<1x16x128xi32>
    %165 = vector.shape_cast %164 : vector<1x16x128xi32> to vector<16x128xi32>
    %c0_69 = arith.constant 0 : index
    %c0_70 = arith.constant 0 : index
    %166 = memref.load %arg0[%c0_69, %c0_70] : memref<2x2xi32, #tpu.memory_space<smem>>
    %167 = vector.broadcast %166 : i32 to vector<16x128xi32>
    %168 = arith.cmpi eq, %165, %167 : vector<16x128xi32>
    %169 = arith.extui %168 : vector<16x128xi1> to vector<16x128xi32>
    %170 = arith.sitofp %169 : vector<16x128xi32> to vector<16x128xf32>
    %171 = vector.shape_cast %170 : vector<16x128xf32> to vector<1x16x128xf32>
    %cst_71 = arith.constant dense<0.000000e+00> : vector<1xf32>
    %172 = vector.multi_reduction <add>, %171, %cst_71 [1, 2] : vector<1x16x128xf32> to vector<1xf32>
    %173 = vector.shape_cast %172 : vector<1xf32> to vector<1x1x1xf32>
    %174 = vector.extract %173[0, 0, 0] : f32 from vector<1x1x1xf32>
    %cst_72 = arith.constant 1.000000e+00 : f32
    %175 = arith.maximumf %174, %cst_72 : f32
    %176 = arith.mulf %153, %170 : vector<16x128xf32>
    %177 = vector.shape_cast %176 : vector<16x128xf32> to vector<1x16x128xf32>
    %cst_73 = arith.constant dense<0.000000e+00> : vector<1xf32>
    %178 = vector.multi_reduction <add>, %177, %cst_73 [1, 2] : vector<1x16x128xf32> to vector<1xf32>
    %179 = vector.shape_cast %178 : vector<1xf32> to vector<1x1x1xf32>
    %180 = vector.extract %179[0, 0, 0] : f32 from vector<1x1x1xf32>
    %c0_74 = arith.constant 0 : index
    %c1_75 = arith.constant 1 : index
    %181 = memref.load %arg0[%c0_74, %c1_75] : memref<2x2xi32, #tpu.memory_space<smem>>
    %182 = vector.broadcast %181 : i32 to vector<16x128xi32>
    %183 = arith.cmpi eq, %165, %182 : vector<16x128xi32>
    %184 = arith.extui %183 : vector<16x128xi1> to vector<16x128xi32>
    %185 = arith.sitofp %184 : vector<16x128xi32> to vector<16x128xf32>
    %186 = vector.shape_cast %185 : vector<16x128xf32> to vector<1x16x128xf32>
    %cst_76 = arith.constant dense<0.000000e+00> : vector<1xf32>
    %187 = vector.multi_reduction <add>, %186, %cst_76 [1, 2] : vector<1x16x128xf32> to vector<1xf32>
    %188 = vector.shape_cast %187 : vector<1xf32> to vector<1x1x1xf32>
    %189 = vector.extract %188[0, 0, 0] : f32 from vector<1x1x1xf32>
    %cst_77 = arith.constant 1.000000e+00 : f32
    %190 = arith.maximumf %189, %cst_77 : f32
    %191 = arith.mulf %153, %185 : vector<16x128xf32>
    %192 = vector.shape_cast %191 : vector<16x128xf32> to vector<1x16x128xf32>
    %cst_78 = arith.constant dense<0.000000e+00> : vector<1xf32>
    %193 = vector.multi_reduction <add>, %192, %cst_78 [1, 2] : vector<1x16x128xf32> to vector<1xf32>
    %194 = vector.shape_cast %193 : vector<1xf32> to vector<1x1x1xf32>
    %195 = vector.extract %194[0, 0, 0] : f32 from vector<1x1x1xf32>
    %c1_79 = arith.constant 1 : index
    %c0_80 = arith.constant 0 : index
    %c0_81 = arith.constant 0 : index
    %196 = vector.load %arg5[%c1_79, %c0_80, %c0_81] : memref<2x16x128xi32, #tpu.memory_space<vmem>>, vector<1x16x128xi32>
    %197 = vector.shape_cast %196 : vector<1x16x128xi32> to vector<16x128xi32>
    %c1_82 = arith.constant 1 : index
    %c0_83 = arith.constant 0 : index
    %198 = memref.load %arg0[%c1_82, %c0_83] : memref<2x2xi32, #tpu.memory_space<smem>>
    %199 = vector.broadcast %198 : i32 to vector<16x128xi32>
    %200 = arith.cmpi eq, %197, %199 : vector<16x128xi32>
    %201 = arith.extui %200 : vector<16x128xi1> to vector<16x128xi32>
    %202 = arith.sitofp %201 : vector<16x128xi32> to vector<16x128xf32>
    %203 = vector.shape_cast %202 : vector<16x128xf32> to vector<1x16x128xf32>
    %cst_84 = arith.constant dense<0.000000e+00> : vector<1xf32>
    %204 = vector.multi_reduction <add>, %203, %cst_84 [1, 2] : vector<1x16x128xf32> to vector<1xf32>
    %205 = vector.shape_cast %204 : vector<1xf32> to vector<1x1x1xf32>
    %206 = vector.extract %205[0, 0, 0] : f32 from vector<1x1x1xf32>
    %cst_85 = arith.constant 1.000000e+00 : f32
    %207 = arith.maximumf %206, %cst_85 : f32
    %208 = arith.mulf %163, %202 : vector<16x128xf32>
    %209 = vector.shape_cast %208 : vector<16x128xf32> to vector<1x16x128xf32>
    %cst_86 = arith.constant dense<0.000000e+00> : vector<1xf32>
    %210 = vector.multi_reduction <add>, %209, %cst_86 [1, 2] : vector<1x16x128xf32> to vector<1xf32>
    %211 = vector.shape_cast %210 : vector<1xf32> to vector<1x1x1xf32>
    %212 = vector.extract %211[0, 0, 0] : f32 from vector<1x1x1xf32>
    %c1_87 = arith.constant 1 : index
    %c1_88 = arith.constant 1 : index
    %213 = memref.load %arg0[%c1_87, %c1_88] : memref<2x2xi32, #tpu.memory_space<smem>>
    %214 = vector.broadcast %213 : i32 to vector<16x128xi32>
    %215 = arith.cmpi eq, %197, %214 : vector<16x128xi32>
    %216 = arith.extui %215 : vector<16x128xi1> to vector<16x128xi32>
    %217 = arith.sitofp %216 : vector<16x128xi32> to vector<16x128xf32>
    %218 = vector.shape_cast %217 : vector<16x128xf32> to vector<1x16x128xf32>
    %cst_89 = arith.constant dense<0.000000e+00> : vector<1xf32>
    %219 = vector.multi_reduction <add>, %218, %cst_89 [1, 2] : vector<1x16x128xf32> to vector<1xf32>
    %220 = vector.shape_cast %219 : vector<1xf32> to vector<1x1x1xf32>
    %221 = vector.extract %220[0, 0, 0] : f32 from vector<1x1x1xf32>
    %cst_90 = arith.constant 1.000000e+00 : f32
    %222 = arith.maximumf %221, %cst_90 : f32
    %223 = arith.mulf %163, %217 : vector<16x128xf32>
    %224 = vector.shape_cast %223 : vector<16x128xf32> to vector<1x16x128xf32>
    %cst_91 = arith.constant dense<0.000000e+00> : vector<1xf32>
    %225 = vector.multi_reduction <add>, %224, %cst_91 [1, 2] : vector<1x16x128xf32> to vector<1xf32>
    %226 = vector.shape_cast %225 : vector<1xf32> to vector<1x1x1xf32>
    %227 = vector.extract %226[0, 0, 0] : f32 from vector<1x1x1xf32>
    %228 = arith.divf %180, %175 : f32
    %229 = vector.broadcast %228 : f32 to vector<16x128xf32>
    %230 = arith.subf %153, %229 : vector<16x128xf32>
    %231 = arith.mulf %230, %170 : vector<16x128xf32>
    %232 = arith.mulf %231, %231 : vector<16x128xf32>
    %233 = vector.shape_cast %232 : vector<16x128xf32> to vector<1x16x128xf32>
    %cst_92 = arith.constant dense<0.000000e+00> : vector<1xf32>
    %234 = vector.multi_reduction <add>, %233, %cst_92 [1, 2] : vector<1x16x128xf32> to vector<1xf32>
    %235 = vector.shape_cast %234 : vector<1xf32> to vector<1x1x1xf32>
    %236 = vector.extract %235[0, 0, 0] : f32 from vector<1x1x1xf32>
    %237 = arith.divf %236, %175 : f32
    %238 = math.exp %228 : f32
    %c0_93 = arith.constant 0 : index
    %c0_94 = arith.constant 0 : index
    %c0_95 = arith.constant 0 : index
    %239 = memref.load %arg2[%c0_93, %c0_94, %c0_95] : memref<2x2x2xf32, #tpu.memory_space<smem>>
    %c0_96 = arith.constant 0 : index
    %c0_97 = arith.constant 0 : index
    %c1_98 = arith.constant 1 : index
    %240 = memref.load %arg2[%c0_96, %c0_97, %c1_98] : memref<2x2x2xf32, #tpu.memory_space<smem>>
    %241 = vector.broadcast %239 : f32 to vector<16x128xf32>
    %242 = arith.subf %147, %241 : vector<16x128xf32>
    %243 = arith.mulf %242, %242 : vector<16x128xf32>
    %244 = vector.broadcast %240 : f32 to vector<16x128xf32>
    %245 = arith.subf %151, %244 : vector<16x128xf32>
    %246 = arith.mulf %245, %245 : vector<16x128xf32>
    %247 = arith.addf %243, %246 : vector<16x128xf32>
    %cst_99 = arith.constant 0.000000e+00 : f32
    %248 = vector.broadcast %cst_99 : f32 to vector<16x128xf32>
    %249 = arith.subf %248, %247 : vector<16x128xf32>
    %250 = vector.broadcast %238 : f32 to vector<16x128xf32>
    %251 = arith.mulf %249, %250 : vector<16x128xf32>
    %252 = math.exp %251 : vector<16x128xf32>
    %c0_100 = arith.constant 0 : index
    %c0_101 = arith.constant 0 : index
    %c0_102 = arith.constant 0 : index
    %253 = memref.load %arg1[%c0_100, %c0_101, %c0_102] : memref<2x2x4xi32, #tpu.memory_space<smem>>
    %c0_103 = arith.constant 0 : index
    %c0_104 = arith.constant 0 : index
    %c1_105 = arith.constant 1 : index
    %254 = memref.load %arg1[%c0_103, %c0_104, %c1_105] : memref<2x2x4xi32, #tpu.memory_space<smem>>
    %c0_106 = arith.constant 0 : index
    %c0_107 = arith.constant 0 : index
    %c2_108 = arith.constant 2 : index
    %255 = memref.load %arg1[%c0_106, %c0_107, %c2_108] : memref<2x2x4xi32, #tpu.memory_space<smem>>
    %c0_109 = arith.constant 0 : index
    %c0_110 = arith.constant 0 : index
    %c3_111 = arith.constant 3 : index
    %256 = memref.load %arg1[%c0_109, %c0_110, %c3_111] : memref<2x2x4xi32, #tpu.memory_space<smem>>
    %257 = vector.broadcast %253 : i32 to vector<16x128xi32>
    %258 = arith.cmpi sge, %138, %257 : vector<16x128xi32>
    %259 = vector.broadcast %255 : i32 to vector<16x128xi32>
    %260 = arith.cmpi slt, %138, %259 : vector<16x128xi32>
    %261 = arith.andi %258, %260 : vector<16x128xi1>
    %262 = vector.broadcast %254 : i32 to vector<16x128xi32>
    %263 = arith.cmpi sge, %139, %262 : vector<16x128xi32>
    %264 = arith.andi %261, %263 : vector<16x128xi1>
    %265 = vector.broadcast %256 : i32 to vector<16x128xi32>
    %266 = arith.cmpi slt, %139, %265 : vector<16x128xi32>
    %267 = arith.andi %264, %266 : vector<16x128xi1>
    %cst_112 = arith.constant 2.000000e+00 : f32
    %268 = vector.broadcast %cst_112 : f32 to vector<16x128xf32>
    %269 = arith.mulf %268, %252 : vector<16x128xf32>
    %cst_113 = arith.constant 1.000000e+00 : f32
    %270 = vector.broadcast %cst_113 : f32 to vector<16x128xf32>
    %271 = arith.subf %269, %270 : vector<16x128xf32>
    %cst_114 = arith.constant -1.000000e+09 : f32
    %272 = vector.broadcast %cst_114 : f32 to vector<16x128xf32>
    %273 = arith.select %267, %271, %272 : vector<16x128xi1>, vector<16x128xf32>
    %c0_115 = arith.constant 0 : index
    %c0_116 = arith.constant 0 : index
    %c0_117 = arith.constant 0 : index
    %c0_118 = arith.constant 0 : index
    %274 = vector.load %arg13[%c0_115, %c0_116, %c0_117, %c0_118] : memref<2x2x16x128xf32, #tpu.memory_space<vmem>>, vector<1x1x16x128xf32>
    %275 = vector.shape_cast %274 : vector<1x1x16x128xf32> to vector<16x128xf32>
    %276 = vector.shape_cast %273 : vector<16x128xf32> to vector<1x1x16x128xf32>
    tpu.vector_store %arg13[%c0_115, %c0_116, %c0_117, %c0_118], %276 {strides = array<i32>} : memref<2x2x16x128xf32, #tpu.memory_space<vmem>>, vector<1x1x16x128xf32>,
    %cst_119 = arith.constant 0.000000e+00 : f32
    %277 = vector.broadcast %cst_119 : f32 to vector<16x128xf32>
    %278 = arith.select %267, %170, %277 : vector<16x128xi1>, vector<16x128xf32>
    %c0_120 = arith.constant 0 : index
    %c0_121 = arith.constant 0 : index
    %c0_122 = arith.constant 0 : index
    %c0_123 = arith.constant 0 : index
    %279 = vector.load %arg14[%c0_120, %c0_121, %c0_122, %c0_123] : memref<2x2x16x128xf32, #tpu.memory_space<vmem>>, vector<1x1x16x128xf32>
    %280 = vector.shape_cast %279 : vector<1x1x16x128xf32> to vector<16x128xf32>
    %281 = vector.shape_cast %278 : vector<16x128xf32> to vector<1x1x16x128xf32>
    tpu.vector_store %arg14[%c0_120, %c0_121, %c0_122, %c0_123], %281 {strides = array<i32>} : memref<2x2x16x128xf32, #tpu.memory_space<vmem>>, vector<1x1x16x128xf32>,
    %c0_124 = arith.constant 0 : index
    %c0_125 = arith.constant 0 : index
    %282 = memref.load %arg15[%c0_124, %c0_125] : memref<2x2xf32, #tpu.memory_space<smem>>
    memref.store %237, %arg15[%c0_124, %c0_125] : memref<2x2xf32, #tpu.memory_space<smem>>
    %283 = arith.divf %195, %190 : f32
    %284 = vector.broadcast %283 : f32 to vector<16x128xf32>
    %285 = arith.subf %153, %284 : vector<16x128xf32>
    %286 = arith.mulf %285, %185 : vector<16x128xf32>
    %287 = arith.mulf %286, %286 : vector<16x128xf32>
    %288 = vector.shape_cast %287 : vector<16x128xf32> to vector<1x16x128xf32>
    %cst_126 = arith.constant dense<0.000000e+00> : vector<1xf32>
    %289 = vector.multi_reduction <add>, %288, %cst_126 [1, 2] : vector<1x16x128xf32> to vector<1xf32>
    %290 = vector.shape_cast %289 : vector<1xf32> to vector<1x1x1xf32>
    %291 = vector.extract %290[0, 0, 0] : f32 from vector<1x1x1xf32>
    %292 = arith.divf %291, %190 : f32
    %293 = math.exp %283 : f32
    %c0_127 = arith.constant 0 : index
    %c1_128 = arith.constant 1 : index
    %c0_129 = arith.constant 0 : index
    %294 = memref.load %arg2[%c0_127, %c1_128, %c0_129] : memref<2x2x2xf32, #tpu.memory_space<smem>>
    %c0_130 = arith.constant 0 : index
    %c1_131 = arith.constant 1 : index
    %c1_132 = arith.constant 1 : index
    %295 = memref.load %arg2[%c0_130, %c1_131, %c1_132] : memref<2x2x2xf32, #tpu.memory_space<smem>>
    %296 = vector.broadcast %294 : f32 to vector<16x128xf32>
    %297 = arith.subf %147, %296 : vector<16x128xf32>
    %298 = arith.mulf %297, %297 : vector<16x128xf32>
    %299 = vector.broadcast %295 : f32 to vector<16x128xf32>
    %300 = arith.subf %151, %299 : vector<16x128xf32>
    %301 = arith.mulf %300, %300 : vector<16x128xf32>
    %302 = arith.addf %298, %301 : vector<16x128xf32>
    %cst_133 = arith.constant 0.000000e+00 : f32
    %303 = vector.broadcast %cst_133 : f32 to vector<16x128xf32>
    %304 = arith.subf %303, %302 : vector<16x128xf32>
    %305 = vector.broadcast %293 : f32 to vector<16x128xf32>
    %306 = arith.mulf %304, %305 : vector<16x128xf32>
    %307 = math.exp %306 : vector<16x128xf32>
    %c0_134 = arith.constant 0 : index
    %c1_135 = arith.constant 1 : index
    %c0_136 = arith.constant 0 : index
    %308 = memref.load %arg1[%c0_134, %c1_135, %c0_136] : memref<2x2x4xi32, #tpu.memory_space<smem>>
    %c0_137 = arith.constant 0 : index
    %c1_138 = arith.constant 1 : index
    %c1_139 = arith.constant 1 : index
    %309 = memref.load %arg1[%c0_137, %c1_138, %c1_139] : memref<2x2x4xi32, #tpu.memory_space<smem>>
    %c0_140 = arith.constant 0 : index
    %c1_141 = arith.constant 1 : index
    %c2_142 = arith.constant 2 : index
    %310 = memref.load %arg1[%c0_140, %c1_141, %c2_142] : memref<2x2x4xi32, #tpu.memory_space<smem>>
    %c0_143 = arith.constant 0 : index
    %c1_144 = arith.constant 1 : index
    %c3_145 = arith.constant 3 : index
    %311 = memref.load %arg1[%c0_143, %c1_144, %c3_145] : memref<2x2x4xi32, #tpu.memory_space<smem>>
    %312 = vector.broadcast %308 : i32 to vector<16x128xi32>
    %313 = arith.cmpi sge, %138, %312 : vector<16x128xi32>
    %314 = vector.broadcast %310 : i32 to vector<16x128xi32>
    %315 = arith.cmpi slt, %138, %314 : vector<16x128xi32>
    %316 = arith.andi %313, %315 : vector<16x128xi1>
    %317 = vector.broadcast %309 : i32 to vector<16x128xi32>
    %318 = arith.cmpi sge, %139, %317 : vector<16x128xi32>
    %319 = arith.andi %316, %318 : vector<16x128xi1>
    %320 = vector.broadcast %311 : i32 to vector<16x128xi32>
    %321 = arith.cmpi slt, %139, %320 : vector<16x128xi32>
    %322 = arith.andi %319, %321 : vector<16x128xi1>
    %cst_146 = arith.constant 2.000000e+00 : f32
    %323 = vector.broadcast %cst_146 : f32 to vector<16x128xf32>
    %324 = arith.mulf %323, %307 : vector<16x128xf32>
    %cst_147 = arith.constant 1.000000e+00 : f32
    %325 = vector.broadcast %cst_147 : f32 to vector<16x128xf32>
    %326 = arith.subf %324, %325 : vector<16x128xf32>
    %cst_148 = arith.constant -1.000000e+09 : f32
    %327 = vector.broadcast %cst_148 : f32 to vector<16x128xf32>
    %328 = arith.select %322, %326, %327 : vector<16x128xi1>, vector<16x128xf32>
    %c0_149 = arith.constant 0 : index
    %c1_150 = arith.constant 1 : index
    %c0_151 = arith.constant 0 : index
    %c0_152 = arith.constant 0 : index
    %329 = vector.load %arg13[%c0_149, %c1_150, %c0_151, %c0_152] : memref<2x2x16x128xf32, #tpu.memory_space<vmem>>, vector<1x1x16x128xf32>
    %330 = vector.shape_cast %329 : vector<1x1x16x128xf32> to vector<16x128xf32>
    %331 = vector.shape_cast %328 : vector<16x128xf32> to vector<1x1x16x128xf32>
    tpu.vector_store %arg13[%c0_149, %c1_150, %c0_151, %c0_152], %331 {strides = array<i32>} : memref<2x2x16x128xf32, #tpu.memory_space<vmem>>, vector<1x1x16x128xf32>,
    %cst_153 = arith.constant 0.000000e+00 : f32
    %332 = vector.broadcast %cst_153 : f32 to vector<16x128xf32>
    %333 = arith.select %322, %185, %332 : vector<16x128xi1>, vector<16x128xf32>
    %c0_154 = arith.constant 0 : index
    %c1_155 = arith.constant 1 : index
    %c0_156 = arith.constant 0 : index
    %c0_157 = arith.constant 0 : index
    %334 = vector.load %arg14[%c0_154, %c1_155, %c0_156, %c0_157] : memref<2x2x16x128xf32, #tpu.memory_space<vmem>>, vector<1x1x16x128xf32>
    %335 = vector.shape_cast %334 : vector<1x1x16x128xf32> to vector<16x128xf32>
    %336 = vector.shape_cast %333 : vector<16x128xf32> to vector<1x1x16x128xf32>
    tpu.vector_store %arg14[%c0_154, %c1_155, %c0_156, %c0_157], %336 {strides = array<i32>} : memref<2x2x16x128xf32, #tpu.memory_space<vmem>>, vector<1x1x16x128xf32>,
    %c0_158 = arith.constant 0 : index
    %c1_159 = arith.constant 1 : index
    %337 = memref.load %arg15[%c0_158, %c1_159] : memref<2x2xf32, #tpu.memory_space<smem>>
    memref.store %292, %arg15[%c0_158, %c1_159] : memref<2x2xf32, #tpu.memory_space<smem>>
    %338 = arith.divf %212, %207 : f32
    %339 = vector.broadcast %338 : f32 to vector<16x128xf32>
    %340 = arith.subf %163, %339 : vector<16x128xf32>
    %341 = arith.mulf %340, %202 : vector<16x128xf32>
    %342 = arith.mulf %341, %341 : vector<16x128xf32>
    %343 = vector.shape_cast %342 : vector<16x128xf32> to vector<1x16x128xf32>
    %cst_160 = arith.constant dense<0.000000e+00> : vector<1xf32>
    %344 = vector.multi_reduction <add>, %343, %cst_160 [1, 2] : vector<1x16x128xf32> to vector<1xf32>
    %345 = vector.shape_cast %344 : vector<1xf32> to vector<1x1x1xf32>
    %346 = vector.extract %345[0, 0, 0] : f32 from vector<1x1x1xf32>
    %347 = arith.divf %346, %207 : f32
    %348 = math.exp %338 : f32
    %c1_161 = arith.constant 1 : index
    %c0_162 = arith.constant 0 : index
    %c0_163 = arith.constant 0 : index
    %349 = memref.load %arg2[%c1_161, %c0_162, %c0_163] : memref<2x2x2xf32, #tpu.memory_space<smem>>
    %c1_164 = arith.constant 1 : index
    %c0_165 = arith.constant 0 : index
    %c1_166 = arith.constant 1 : index
    %350 = memref.load %arg2[%c1_164, %c0_165, %c1_166] : memref<2x2x2xf32, #tpu.memory_space<smem>>
    %351 = vector.broadcast %349 : f32 to vector<16x128xf32>
    %352 = arith.subf %157, %351 : vector<16x128xf32>
    %353 = arith.mulf %352, %352 : vector<16x128xf32>
    %354 = vector.broadcast %350 : f32 to vector<16x128xf32>
    %355 = arith.subf %161, %354 : vector<16x128xf32>
    %356 = arith.mulf %355, %355 : vector<16x128xf32>
    %357 = arith.addf %353, %356 : vector<16x128xf32>
    %cst_167 = arith.constant 0.000000e+00 : f32
    %358 = vector.broadcast %cst_167 : f32 to vector<16x128xf32>
    %359 = arith.subf %358, %357 : vector<16x128xf32>
    %360 = vector.broadcast %348 : f32 to vector<16x128xf32>
    %361 = arith.mulf %359, %360 : vector<16x128xf32>
    %362 = math.exp %361 : vector<16x128xf32>
    %c1_168 = arith.constant 1 : index
    %c0_169 = arith.constant 0 : index
    %c0_170 = arith.constant 0 : index
    %363 = memref.load %arg1[%c1_168, %c0_169, %c0_170] : memref<2x2x4xi32, #tpu.memory_space<smem>>
    %c1_171 = arith.constant 1 : index
    %c0_172 = arith.constant 0 : index
    %c1_173 = arith.constant 1 : index
    %364 = memref.load %arg1[%c1_171, %c0_172, %c1_173] : memref<2x2x4xi32, #tpu.memory_space<smem>>
    %c1_174 = arith.constant 1 : index
    %c0_175 = arith.constant 0 : index
    %c2_176 = arith.constant 2 : index
    %365 = memref.load %arg1[%c1_174, %c0_175, %c2_176] : memref<2x2x4xi32, #tpu.memory_space<smem>>
    %c1_177 = arith.constant 1 : index
    %c0_178 = arith.constant 0 : index
    %c3_179 = arith.constant 3 : index
    %366 = memref.load %arg1[%c1_177, %c0_178, %c3_179] : memref<2x2x4xi32, #tpu.memory_space<smem>>
    %367 = vector.broadcast %363 : i32 to vector<16x128xi32>
    %368 = arith.cmpi sge, %138, %367 : vector<16x128xi32>
    %369 = vector.broadcast %365 : i32 to vector<16x128xi32>
    %370 = arith.cmpi slt, %138, %369 : vector<16x128xi32>
    %371 = arith.andi %368, %370 : vector<16x128xi1>
    %372 = vector.broadcast %364 : i32 to vector<16x128xi32>
    %373 = arith.cmpi sge, %139, %372 : vector<16x128xi32>
    %374 = arith.andi %371, %373 : vector<16x128xi1>
    %375 = vector.broadcast %366 : i32 to vector<16x128xi32>
    %376 = arith.cmpi slt, %139, %375 : vector<16x128xi32>
    %377 = arith.andi %374, %376 : vector<16x128xi1>
    %cst_180 = arith.constant 2.000000e+00 : f32
    %378 = vector.broadcast %cst_180 : f32 to vector<16x128xf32>
    %379 = arith.mulf %378, %362 : vector<16x128xf32>
    %cst_181 = arith.constant 1.000000e+00 : f32
    %380 = vector.broadcast %cst_181 : f32 to vector<16x128xf32>
    %381 = arith.subf %379, %380 : vector<16x128xf32>
    %cst_182 = arith.constant -1.000000e+09 : f32
    %382 = vector.broadcast %cst_182 : f32 to vector<16x128xf32>
    %383 = arith.select %377, %381, %382 : vector<16x128xi1>, vector<16x128xf32>
    %c1_183 = arith.constant 1 : index
    %c0_184 = arith.constant 0 : index
    %c0_185 = arith.constant 0 : index
    %c0_186 = arith.constant 0 : index
    %384 = vector.load %arg13[%c1_183, %c0_184, %c0_185, %c0_186] : memref<2x2x16x128xf32, #tpu.memory_space<vmem>>, vector<1x1x16x128xf32>
    %385 = vector.shape_cast %384 : vector<1x1x16x128xf32> to vector<16x128xf32>
    %386 = vector.shape_cast %383 : vector<16x128xf32> to vector<1x1x16x128xf32>
    tpu.vector_store %arg13[%c1_183, %c0_184, %c0_185, %c0_186], %386 {strides = array<i32>} : memref<2x2x16x128xf32, #tpu.memory_space<vmem>>, vector<1x1x16x128xf32>,
    %cst_187 = arith.constant 0.000000e+00 : f32
    %387 = vector.broadcast %cst_187 : f32 to vector<16x128xf32>
    %388 = arith.select %377, %202, %387 : vector<16x128xi1>, vector<16x128xf32>
    %c1_188 = arith.constant 1 : index
    %c0_189 = arith.constant 0 : index
    %c0_190 = arith.constant 0 : index
    %c0_191 = arith.constant 0 : index
    %389 = vector.load %arg14[%c1_188, %c0_189, %c0_190, %c0_191] : memref<2x2x16x128xf32, #tpu.memory_space<vmem>>, vector<1x1x16x128xf32>
    %390 = vector.shape_cast %389 : vector<1x1x16x128xf32> to vector<16x128xf32>
    %391 = vector.shape_cast %388 : vector<16x128xf32> to vector<1x1x16x128xf32>
    tpu.vector_store %arg14[%c1_188, %c0_189, %c0_190, %c0_191], %391 {strides = array<i32>} : memref<2x2x16x128xf32, #tpu.memory_space<vmem>>, vector<1x1x16x128xf32>,
    %c1_192 = arith.constant 1 : index
    %c0_193 = arith.constant 0 : index
    %392 = memref.load %arg15[%c1_192, %c0_193] : memref<2x2xf32, #tpu.memory_space<smem>>
    memref.store %347, %arg15[%c1_192, %c0_193] : memref<2x2xf32, #tpu.memory_space<smem>>
    %393 = arith.divf %227, %222 : f32
    %394 = vector.broadcast %393 : f32 to vector<16x128xf32>
    %395 = arith.subf %163, %394 : vector<16x128xf32>
    %396 = arith.mulf %395, %217 : vector<16x128xf32>
    %397 = arith.mulf %396, %396 : vector<16x128xf32>
    %398 = vector.shape_cast %397 : vector<16x128xf32> to vector<1x16x128xf32>
    %cst_194 = arith.constant dense<0.000000e+00> : vector<1xf32>
    %399 = vector.multi_reduction <add>, %398, %cst_194 [1, 2] : vector<1x16x128xf32> to vector<1xf32>
    %400 = vector.shape_cast %399 : vector<1xf32> to vector<1x1x1xf32>
    %401 = vector.extract %400[0, 0, 0] : f32 from vector<1x1x1xf32>
    %402 = arith.divf %401, %222 : f32
    %403 = math.exp %393 : f32
    %c1_195 = arith.constant 1 : index
    %c1_196 = arith.constant 1 : index
    %c0_197 = arith.constant 0 : index
    %404 = memref.load %arg2[%c1_195, %c1_196, %c0_197] : memref<2x2x2xf32, #tpu.memory_space<smem>>
    %c1_198 = arith.constant 1 : index
    %c1_199 = arith.constant 1 : index
    %c1_200 = arith.constant 1 : index
    %405 = memref.load %arg2[%c1_198, %c1_199, %c1_200] : memref<2x2x2xf32, #tpu.memory_space<smem>>
    %406 = vector.broadcast %404 : f32 to vector<16x128xf32>
    %407 = arith.subf %157, %406 : vector<16x128xf32>
    %408 = arith.mulf %407, %407 : vector<16x128xf32>
    %409 = vector.broadcast %405 : f32 to vector<16x128xf32>
    %410 = arith.subf %161, %409 : vector<16x128xf32>
    %411 = arith.mulf %410, %410 : vector<16x128xf32>
    %412 = arith.addf %408, %411 : vector<16x128xf32>
    %cst_201 = arith.constant 0.000000e+00 : f32
    %413 = vector.broadcast %cst_201 : f32 to vector<16x128xf32>
    %414 = arith.subf %413, %412 : vector<16x128xf32>
    %415 = vector.broadcast %403 : f32 to vector<16x128xf32>
    %416 = arith.mulf %414, %415 : vector<16x128xf32>
    %417 = math.exp %416 : vector<16x128xf32>
    %c1_202 = arith.constant 1 : index
    %c1_203 = arith.constant 1 : index
    %c0_204 = arith.constant 0 : index
    %418 = memref.load %arg1[%c1_202, %c1_203, %c0_204] : memref<2x2x4xi32, #tpu.memory_space<smem>>
    %c1_205 = arith.constant 1 : index
    %c1_206 = arith.constant 1 : index
    %c1_207 = arith.constant 1 : index
    %419 = memref.load %arg1[%c1_205, %c1_206, %c1_207] : memref<2x2x4xi32, #tpu.memory_space<smem>>
    %c1_208 = arith.constant 1 : index
    %c1_209 = arith.constant 1 : index
    %c2_210 = arith.constant 2 : index
    %420 = memref.load %arg1[%c1_208, %c1_209, %c2_210] : memref<2x2x4xi32, #tpu.memory_space<smem>>
    %c1_211 = arith.constant 1 : index
    %c1_212 = arith.constant 1 : index
    %c3_213 = arith.constant 3 : index
    %421 = memref.load %arg1[%c1_211, %c1_212, %c3_213] : memref<2x2x4xi32, #tpu.memory_space<smem>>
    %422 = vector.broadcast %418 : i32 to vector<16x128xi32>
    %423 = arith.cmpi sge, %138, %422 : vector<16x128xi32>
    %424 = vector.broadcast %420 : i32 to vector<16x128xi32>
    %425 = arith.cmpi slt, %138, %424 : vector<16x128xi32>
    %426 = arith.andi %423, %425 : vector<16x128xi1>
    %427 = vector.broadcast %419 : i32 to vector<16x128xi32>
    %428 = arith.cmpi sge, %139, %427 : vector<16x128xi32>
    %429 = arith.andi %426, %428 : vector<16x128xi1>
    %430 = vector.broadcast %421 : i32 to vector<16x128xi32>
    %431 = arith.cmpi slt, %139, %430 : vector<16x128xi32>
    %432 = arith.andi %429, %431 : vector<16x128xi1>
    %cst_214 = arith.constant 2.000000e+00 : f32
    %433 = vector.broadcast %cst_214 : f32 to vector<16x128xf32>
    %434 = arith.mulf %433, %417 : vector<16x128xf32>
    %cst_215 = arith.constant 1.000000e+00 : f32
    %435 = vector.broadcast %cst_215 : f32 to vector<16x128xf32>
    %436 = arith.subf %434, %435 : vector<16x128xf32>
    %cst_216 = arith.constant -1.000000e+09 : f32
    %437 = vector.broadcast %cst_216 : f32 to vector<16x128xf32>
    %438 = arith.select %432, %436, %437 : vector<16x128xi1>, vector<16x128xf32>
    %c1_217 = arith.constant 1 : index
    %c1_218 = arith.constant 1 : index
    %c0_219 = arith.constant 0 : index
    %c0_220 = arith.constant 0 : index
    %439 = vector.load %arg13[%c1_217, %c1_218, %c0_219, %c0_220] : memref<2x2x16x128xf32, #tpu.memory_space<vmem>>, vector<1x1x16x128xf32>
    %440 = vector.shape_cast %439 : vector<1x1x16x128xf32> to vector<16x128xf32>
    %441 = vector.shape_cast %438 : vector<16x128xf32> to vector<1x1x16x128xf32>
    tpu.vector_store %arg13[%c1_217, %c1_218, %c0_219, %c0_220], %441 {strides = array<i32>} : memref<2x2x16x128xf32, #tpu.memory_space<vmem>>, vector<1x1x16x128xf32>,
    %cst_221 = arith.constant 0.000000e+00 : f32
    %442 = vector.broadcast %cst_221 : f32 to vector<16x128xf32>
    %443 = arith.select %432, %217, %442 : vector<16x128xi1>, vector<16x128xf32>
    %c1_222 = arith.constant 1 : index
    %c1_223 = arith.constant 1 : index
    %c0_224 = arith.constant 0 : index
    %c0_225 = arith.constant 0 : index
    %444 = vector.load %arg14[%c1_222, %c1_223, %c0_224, %c0_225] : memref<2x2x16x128xf32, #tpu.memory_space<vmem>>, vector<1x1x16x128xf32>
    %445 = vector.shape_cast %444 : vector<1x1x16x128xf32> to vector<16x128xf32>
    %446 = vector.shape_cast %443 : vector<16x128xf32> to vector<1x1x16x128xf32>
    tpu.vector_store %arg14[%c1_222, %c1_223, %c0_224, %c0_225], %446 {strides = array<i32>} : memref<2x2x16x128xf32, #tpu.memory_space<vmem>>, vector<1x1x16x128xf32>,
    %c1_226 = arith.constant 1 : index
    %c1_227 = arith.constant 1 : index
    %447 = memref.load %arg15[%c1_226, %c1_227] : memref<2x2xf32, #tpu.memory_space<smem>>
    memref.store %402, %arg15[%c1_226, %c1_227] : memref<2x2xf32, #tpu.memory_space<smem>>
    return
  }
}

</mosaic_0001>

<llo_original>
// kernel: fcos_loss_forward.1
$region0: #{fcos_loss_forward.1}
  #allocation0 [shape = 'u32[]', space=smem, size = 0x4, offset = 0x4, fixed_abs, tag = 'smem constant byte address 0x4 - core index']
  #allocation1 [shape = 'u32[144,128]{1,0:T(1,128)}', space=vmem, size = 0x12000, scoped, tag = 'internal scratch']
  %s0 = inlined_call_operand.vmem [shape: s32[2,2], index: 0, kind: input, shape index: {}]
  %s1 = inlined_call_operand.vmem [shape: s32[2,2,4], index: 1, kind: input, shape index: {}]
  %s2 = inlined_call_operand.vmem [shape: f32[2,2,2], index: 2, kind: input, shape index: {}]
  %s3 = inlined_call_operand.vmem [shape: f32[2,3,16,128], index: 3, kind: input, shape index: {}]
  %s4 = inlined_call_operand.vmem [shape: f32[2,16,128], index: 4, kind: input, shape index: {}]
  %s5 = inlined_call_operand.vmem [shape: s32[2,16,128], index: 5, kind: input, shape index: {}]
  %s6 = inlined_call_operand.vmem [shape: f32[160,128], index: 6, kind: input, shape index: {}]
  %s7 = inlined_call_operand.vmem [shape: f32[160,128], index: 7, kind: input, shape index: {}]
  %s8 = inlined_call_operand.vmem [shape: f32[4,2,128], index: 8, kind: input, shape index: {}]
  %s9 = inlined_call_operand.vmem [shape: f32[4,2,128], index: 9, kind: input, shape index: {}]
  %s10 = inlined_call_operand.vmem [shape: f32[2,128], index: 10, kind: input, shape index: {}]
  %s11 = inlined_call_operand.vmem [shape: f32[2,128], index: 11, kind: input, shape index: {}]
  %s12 = inlined_call_operand.vmem [shape: f32[2,128], index: 12, kind: input, shape index: {}]
  %s13 = inlined_call_operand.vmem [shape: f32[2,2,16,128], index: 13, kind: output, shape index: {0}]
  %s14 = inlined_call_operand.vmem [shape: f32[2,2,16,128], index: 14, kind: output, shape index: {1}]
  %s15 = inlined_call_operand.vmem [shape: f32[2,2], index: 15, kind: output, shape index: {2}]
  %s16 = inlined_call_operand.vmem [shape: f32[4], index: 16, kind: output, shape index: {3}]
  %17 = xla_tuple %s13, %s14, %s15, %s16
  %s18 = sld [smem:[#allocation0]]
  $region98: #{fcos_loss_forward.1} parent=0
    _
  %s20 = ssub.s32 1, %s18
  %s21 = scalar_select 0, %s20, %s18
  $region1: #{fcos_loss_forward.1} parent=0
    #allocation2 [shape = 'u8[1024]{0}', space=smem, size = 0x400, scoped, tag = 'input window, operand 0, single buffered']
    #allocation3 [shape = 's32[1]{0}', space=sflag, size = 0x4, scoped, tag = 'scoped memory for fcos_loss_forward.1']
    #allocation4 [shape = 's32[1]{0}', space=sflag, size = 0x4, scoped, tag = 'scoped memory for fcos_loss_forward.1']
    #allocation5 [shape = 'u8[2048]{0}', space=smem, size = 0x800, scoped, tag = 'input window, operand 1, single buffered']
    #allocation6 [shape = 's32[1]{0}', space=sflag, size = 0x4, scoped, tag = 'scoped memory for fcos_loss_forward.1']
    #allocation7 [shape = 'u8[2048]{0}', space=smem, size = 0x800, scoped, tag = 'input window, operand 2, single buffered']
    #allocation8 [shape = 'u8[1024]{0}', space=smem, size = 0x400, scoped, tag = 'output window, operand 2, single buffered']
    #allocation9 [shape = 'u8[512]{0}', space=smem, size = 0x200, scoped, tag = 'output window, operand 3, single buffered']
    #allocation10 [shape = 's32[1]{0}', space=sflag, size = 0x4, scoped, tag = 'scoped memory for fcos_loss_forward.1']
    %22 = vsyncpa [#allocation3], 0
    %23 = vsyncpa [#allocation6], 0
    %24 = vsyncpa [#allocation4], 0
    %25 = vsyncpa [#allocation10], 0
    // Predicated region
    $region2: #{fcos_loss_forward.1} parent=1 // pred_check
      _
    $region3: #{fcos_loss_forward.1} parent=1 // pred_check_branch
      %27 = sbr.rel (0) target = $region5
    $region4: #{fcos_loss_forward.1} parent=1 // pred_region
      %s29 = ssub.s32 32, 32
      %30 = vsyncadd [#allocation3], %s29
      %s32 = sshll.u32 %s0, 4
      %s33 = int_to_ptr.vmem [resolvable:$true] %s32
      %35 = dma.vmem_to_smem %s33, 32, [#allocation2], [#allocation3]
    $region5: #{fcos_loss_forward.1} parent=1 // pred_fallthru
      _
    // Predicated region
    $region6: #{fcos_loss_forward.1} parent=1 // pred_check
      _
    $region7: #{fcos_loss_forward.1} parent=1 // pred_check_branch
      %37 = sbr.rel (0) target = $region9
    $region8: #{fcos_loss_forward.1} parent=1 // pred_region
      %s39 = ssub.s32 64, 64
      %40 = vsyncadd [#allocation6], %s39
      %s41 = sshll.u32 %s1, 4
      %s42 = int_to_ptr.vmem [resolvable:$true] %s41
      %47 = dma.vmem_to_smem %s42, 64, [#allocation5], [#allocation6], 32, 32, 2
    $region9: #{fcos_loss_forward.1} parent=1 // pred_fallthru
      _
    // Predicated region
    $region10: #{fcos_loss_forward.1} parent=1 // pred_check
      _
    $region11: #{fcos_loss_forward.1} parent=1 // pred_check_branch
      %49 = sbr.rel (0) target = $region13
    $region12: #{fcos_loss_forward.1} parent=1 // pred_region
      %s51 = ssub.s32 64, 64
      %52 = vsyncadd [#allocation6], %s51
      %s53 = sshll.u32 %s2, 4
      %s54 = int_to_ptr.vmem [resolvable:$true] %s53
      %59 = dma.vmem_to_smem %s54, 64, [#allocation7], [#allocation6], 32, 32, 2
    $region13: #{fcos_loss_forward.1} parent=1 // pred_fallthru
      _
    // Predicated region
    $region14: #{fcos_loss_forward.1} parent=1 // pred_check
      _
    $region15: #{fcos_loss_forward.1} parent=1 // pred_check_branch
      %61 = sbr.rel (0) target = $region17
    $region16: #{fcos_loss_forward.1} parent=1 // pred_region
      _
    $region17: #{fcos_loss_forward.1} parent=1 // pred_fallthru
      _
    // Predicated region
    $region18: #{fcos_loss_forward.1} parent=1 // pred_check
      _
    $region19: #{fcos_loss_forward.1} parent=1 // pred_check_branch
      %63 = sbr.rel (0) target = $region21
    $region20: #{fcos_loss_forward.1} parent=1 // pred_region
      _
    $region21: #{fcos_loss_forward.1} parent=1 // pred_fallthru
      _
    // Predicated region
    $region22: #{fcos_loss_forward.1} parent=1 // pred_check
      _
    $region23: #{fcos_loss_forward.1} parent=1 // pred_check_branch
      %65 = sbr.rel (0) target = $region25
    $region24: #{fcos_loss_forward.1} parent=1 // pred_region
      _
    $region25: #{fcos_loss_forward.1} parent=1 // pred_fallthru
      _
    // Predicated region
    $region26: #{fcos_loss_forward.1} parent=1 // pred_check
      _
    $region27: #{fcos_loss_forward.1} parent=1 // pred_check_branch
      %67 = sbr.rel (0) target = $region29
    $region28: #{fcos_loss_forward.1} parent=1 // pred_region
      _
    $region29: #{fcos_loss_forward.1} parent=1 // pred_fallthru
      _
    // Predicated region
    $region30: #{fcos_loss_forward.1} parent=1 // pred_check
      _
    $region31: #{fcos_loss_forward.1} parent=1 // pred_check_branch
      %69 = sbr.rel (0) target = $region33
    $region32: #{fcos_loss_forward.1} parent=1 // pred_region
      _
    $region33: #{fcos_loss_forward.1} parent=1 // pred_fallthru
      _
    // Predicated region
    $region34: #{fcos_loss_forward.1} parent=1 // pred_check
      _
    $region35: #{fcos_loss_forward.1} parent=1 // pred_check_branch
      %71 = sbr.rel (0) target = $region37
    $region36: #{fcos_loss_forward.1} parent=1 // pred_region
      _
    $region37: #{fcos_loss_forward.1} parent=1 // pred_fallthru
      _
    // Predicated region
    $region38: #{fcos_loss_forward.1} parent=1 // pred_check
      _
    $region39: #{fcos_loss_forward.1} parent=1 // pred_check_branch
      %73 = sbr.rel (0) target = $region41
    $region40: #{fcos_loss_forward.1} parent=1 // pred_region
      _
    $region41: #{fcos_loss_forward.1} parent=1 // pred_fallthru
      _
    // Predicated region
    $region42: #{fcos_loss_forward.1} parent=1 // pred_check
      _
    $region43: #{fcos_loss_forward.1} parent=1 // pred_check_branch
      %75 = sbr.rel (0) target = $region45
    $region44: #{fcos_loss_forward.1} parent=1 // pred_region
      _
    $region45: #{fcos_loss_forward.1} parent=1 // pred_fallthru
      _
    // Predicated region
    $region46: #{fcos_loss_forward.1} parent=1 // pred_check
      _
    $region47: #{fcos_loss_forward.1} parent=1 // pred_check_branch
      %77 = sbr.rel (0) target = $region49
    $region48: #{fcos_loss_forward.1} parent=1 // pred_region
      _
    $region49: #{fcos_loss_forward.1} parent=1 // pred_fallthru
      _
    // Predicated region
    $region50: #{fcos_loss_forward.1} parent=1 // pred_check
      _
    $region51: #{fcos_loss_forward.1} parent=1 // pred_check_branch
      %79 = sbr.rel (0) target = $region53
    $region52: #{fcos_loss_forward.1} parent=1 // pred_region
      _
    $region53: #{fcos_loss_forward.1} parent=1 // pred_fallthru
      _
    // Predicated region
    $region54: #{fcos_loss_forward.1} parent=1 // pred_check
      _
    $region55: #{fcos_loss_forward.1} parent=1 // pred_check_branch
      %81 = sbr.rel (0) target = $region57
    $region56: #{fcos_loss_forward.1} parent=1 // pred_region
      %82 = dma.done [#allocation3], 32
    $region57: #{fcos_loss_forward.1} parent=1 // pred_fallthru
      _
    // Predicated region
    $region58: #{fcos_loss_forward.1} parent=1 // pred_check
      _
    $region59: #{fcos_loss_forward.1} parent=1 // pred_check_branch
      %84 = sbr.rel (0) target = $region61
    $region60: #{fcos_loss_forward.1} parent=1 // pred_region
      %85 = dma.done [#allocation6], 64
    $region61: #{fcos_loss_forward.1} parent=1 // pred_fallthru
      _
    // Predicated region
    $region62: #{fcos_loss_forward.1} parent=1 // pred_check
      _
    $region63: #{fcos_loss_forward.1} parent=1 // pred_check_branch
      %87 = sbr.rel (0) target = $region65
    $region64: #{fcos_loss_forward.1} parent=1 // pred_region
      %88 = dma.done [#allocation6], 64
    $region65: #{fcos_loss_forward.1} parent=1 // pred_fallthru
      _
    %89 = sfence
    %v90 = vld [vmem:[%s6] sm:$0xff]
    %v91 = vld [vmem:[%s6 + $0x8] sm:$0xff]
    %v92 = vld [vmem:[%s6 + $0x10] sm:$0xff]
    %v93 = vld [vmem:[%s6 + $0x18] sm:$0xff]
    %v94 = vld [vmem:[%s6 + $0x20] sm:$0xff]
    %v95 = vld [vmem:[%s6 + $0x28] sm:$0xff]
    %v96 = vld [vmem:[%s6 + $0x30] sm:$0xff]
    %v97 = vld [vmem:[%s6 + $0x38] sm:$0xff]
    %v98 = vld [vmem:[%s6 + $0x40] sm:$0xff]
    %v99 = vld [vmem:[%s6 + $0x48] sm:$0xff]
    %v100 = vld [vmem:[%s6 + $0x50] sm:$0xff]
    %v101 = vld [vmem:[%s6 + $0x58] sm:$0xff]
    %v102 = vld [vmem:[%s6 + $0x60] sm:$0xff]
    %v103 = vld [vmem:[%s6 + $0x68] sm:$0xff]
    %v104 = vld [vmem:[%s6 + $0x70] sm:$0xff]
    %v105 = vld [vmem:[%s6 + $0x78] sm:$0xff]
    %v106 = vld [vmem:[%s6 + $0x80] sm:$0xff]
    %v107 = vld [vmem:[%s6 + $0x88] sm:$0xff]
    %v108 = vld [vmem:[%s6 + $0x90] sm:$0xff]
    %v109 = vld [vmem:[%s6 + $0x98] sm:$0xff]
    %v110 = vld [vmem:[%s7] sm:$0xff]
    %v111 = vld [vmem:[%s7 + $0x8] sm:$0xff]
    %v112 = vld [vmem:[%s7 + $0x10] sm:$0xff]
    %v113 = vld [vmem:[%s7 + $0x18] sm:$0xff]
    %v114 = vld [vmem:[%s7 + $0x20] sm:$0xff]
    %v115 = vld [vmem:[%s7 + $0x28] sm:$0xff]
    %v116 = vld [vmem:[%s7 + $0x30] sm:$0xff]
    %v117 = vld [vmem:[%s7 + $0x38] sm:$0xff]
    %v118 = vld [vmem:[%s7 + $0x40] sm:$0xff]
    %v119 = vld [vmem:[%s7 + $0x48] sm:$0xff]
    %v120 = vld [vmem:[%s7 + $0x50] sm:$0xff]
    %v121 = vld [vmem:[%s7 + $0x58] sm:$0xff]
    %v122 = vld [vmem:[%s7 + $0x60] sm:$0xff]
    %v123 = vld [vmem:[%s7 + $0x68] sm:$0xff]
    %v124 = vld [vmem:[%s7 + $0x70] sm:$0xff]
    %v125 = vld [vmem:[%s7 + $0x78] sm:$0xff]
    %v126 = vld [vmem:[%s7 + $0x80] sm:$0xff]
    %v127 = vld [vmem:[%s7 + $0x88] sm:$0xff]
    %v128 = vld [vmem:[%s7 + $0x90] sm:$0xff]
    %v129 = vld [vmem:[%s7 + $0x98] sm:$0xff]
    %v130 = vmax.f32 %v90, -30.0
    %v131 = vmax.f32 %v91, -30.0
    %v132 = vmax.f32 %v92, -30.0
    %v133 = vmax.f32 %v93, -30.0
    %v134 = vmax.f32 %v94, -30.0
    %v135 = vmax.f32 %v95, -30.0
    %v136 = vmax.f32 %v96, -30.0
    %v137 = vmax.f32 %v97, -30.0
    %v138 = vmax.f32 %v98, -30.0
    %v139 = vmax.f32 %v99, -30.0
    %v140 = vmax.f32 %v100, -30.0
    %v141 = vmax.f32 %v101, -30.0
    %v142 = vmax.f32 %v102, -30.0
    %v143 = vmax.f32 %v103, -30.0
    %v144 = vmax.f32 %v104, -30.0
    %v145 = vmax.f32 %v105, -30.0
    %v146 = vmax.f32 %v106, -30.0
    %v147 = vmax.f32 %v107, -30.0
    %v148 = vmax.f32 %v108, -30.0
    %v149 = vmax.f32 %v109, -30.0
    %v150 = vsub.f32 0.0, %v130
    %v151 = vsub.f32 0.0, %v131
    %v152 = vsub.f32 0.0, %v132
    %v153 = vsub.f32 0.0, %v133
    %v154 = vsub.f32 0.0, %v134
    %v155 = vsub.f32 0.0, %v135
    %v156 = vsub.f32 0.0, %v136
    %v157 = vsub.f32 0.0, %v137
    %v158 = vsub.f32 0.0, %v138
    %v159 = vsub.f32 0.0, %v139
    %v160 = vsub.f32 0.0, %v140
    %v161 = vsub.f32 0.0, %v141
    %v162 = vsub.f32 0.0, %v142
    %v163 = vsub.f32 0.0, %v143
    %v164 = vsub.f32 0.0, %v144
    %v165 = vsub.f32 0.0, %v145
    %v166 = vsub.f32 0.0, %v146
    %v167 = vsub.f32 0.0, %v147
    %v168 = vsub.f32 0.0, %v148
    %v169 = vsub.f32 0.0, %v149
    %v170 = vmul.f32 %v150, 1.442695
    %v171 = vpow.pop %v170
    %v172 = vmul.f32 %v151, 1.442695
    %v173 = vpow.pop %v172
    %v174 = vmul.f32 %v152, 1.442695
    %v175 = vpow.pop %v174
    %v176 = vmul.f32 %v153, 1.442695
    %v177 = vpow.pop %v176
    %v178 = vmul.f32 %v154, 1.442695
    %v179 = vpow.pop %v178
    %v180 = vmul.f32 %v155, 1.442695
    %v181 = vpow.pop %v180
    %v182 = vmul.f32 %v156, 1.442695
    %v183 = vpow.pop %v182
    %v184 = vmul.f32 %v157, 1.442695
    %v185 = vpow.pop %v184
    %v186 = vmul.f32 %v158, 1.442695
    %v187 = vpow.pop %v186
    %v188 = vmul.f32 %v159, 1.442695
    %v189 = vpow.pop %v188
    %v190 = vmul.f32 %v160, 1.442695
    %v191 = vpow.pop %v190
    %v192 = vmul.f32 %v161, 1.442695
    %v193 = vpow.pop %v192
    %v194 = vmul.f32 %v162, 1.442695
    %v195 = vpow.pop %v194
    %v196 = vmul.f32 %v163, 1.442695
    %v197 = vpow.pop %v196
    %v198 = vmul.f32 %v164, 1.442695
    %v199 = vpow.pop %v198
    %v200 = vmul.f32 %v165, 1.442695
    %v201 = vpow.pop %v200
    %v202 = vmul.f32 %v166, 1.442695
    %v203 = vpow.pop %v202
    %v204 = vmul.f32 %v167, 1.442695
    %v205 = vpow.pop %v204
    %v206 = vmul.f32 %v168, 1.442695
    %v207 = vpow.pop %v206
    %v208 = vmul.f32 %v169, 1.442695
    %v209 = vpow.pop %v208
    %v210 = vadd.f32 %v171, 1.0
    %v211 = vlog2.pop %v210
    %v212 = vmul.f32 %v211, 0.6931472
    %v213 = vmul.f32 -0.5, %v171
    %v214 = vadd.f32 %v213, 1.0
    %v215 = vmul.f32 %v214, %v171
    %v216 = vand.u32 2147483647, %v171
    %vm217 = vcmp.lt.f32.partialorder %v216, 0.0004427343
    %v218 = vsel %vm217, %v215, %v212
    %v219 = vadd.f32 %v173, 1.0
    %v220 = vlog2.pop %v219
    %v221 = vmul.f32 %v220, 0.6931472
    %v222 = vmul.f32 -0.5, %v173
    %v223 = vadd.f32 %v222, 1.0
    %v224 = vmul.f32 %v223, %v173
    %v225 = vand.u32 2147483647, %v173
    %vm226 = vcmp.lt.f32.partialorder %v225, 0.0004427343
    %v227 = vsel %vm226, %v224, %v221
    %v228 = vadd.f32 %v175, 1.0
    %v229 = vlog2.pop %v228
    %v230 = vmul.f32 %v229, 0.6931472
    %v231 = vmul.f32 -0.5, %v175
    %v232 = vadd.f32 %v231, 1.0
    %v233 = vmul.f32 %v232, %v175
    %v234 = vand.u32 2147483647, %v175
    %vm235 = vcmp.lt.f32.partialorder %v234, 0.0004427343
    %v236 = vsel %vm235, %v233, %v230
    %v237 = vadd.f32 %v177, 1.0
    %v238 = vlog2.pop %v237
    %v239 = vmul.f32 %v238, 0.6931472
    %v240 = vmul.f32 -0.5, %v177
    %v241 = vadd.f32 %v240, 1.0
    %v242 = vmul.f32 %v241, %v177
    %v243 = vand.u32 2147483647, %v177
    %vm244 = vcmp.lt.f32.partialorder %v243, 0.0004427343
    %v245 = vsel %vm244, %v242, %v239
    %v246 = vadd.f32 %v179, 1.0
    %v247 = vlog2.pop %v246
    %v248 = vmul.f32 %v247, 0.6931472
    %v249 = vmul.f32 -0.5, %v179
    %v250 = vadd.f32 %v249, 1.0
    %v251 = vmul.f32 %v250, %v179
    %v252 = vand.u32 2147483647, %v179
    %vm253 = vcmp.lt.f32.partialorder %v252, 0.0004427343
    %v254 = vsel %vm253, %v251, %v248
    %v255 = vadd.f32 %v181, 1.0
    %v256 = vlog2.pop %v255
    %v257 = vmul.f32 %v256, 0.6931472
    %v258 = vmul.f32 -0.5, %v181
    %v259 = vadd.f32 %v258, 1.0
    %v260 = vmul.f32 %v259, %v181
    %v261 = vand.u32 2147483647, %v181
    %vm262 = vcmp.lt.f32.partialorder %v261, 0.0004427343
    %v263 = vsel %vm262, %v260, %v257
    %v264 = vadd.f32 %v183, 1.0
    %v265 = vlog2.pop %v264
    %v266 = vmul.f32 %v265, 0.6931472
    %v267 = vmul.f32 -0.5, %v183
    %v268 = vadd.f32 %v267, 1.0
    %v269 = vmul.f32 %v268, %v183
    %v270 = vand.u32 2147483647, %v183
    %vm271 = vcmp.lt.f32.partialorder %v270, 0.0004427343
    %v272 = vsel %vm271, %v269, %v266
    %v273 = vadd.f32 %v185, 1.0
    %v274 = vlog2.pop %v273
    %v275 = vmul.f32 %v274, 0.6931472
    %v276 = vmul.f32 -0.5, %v185
    %v277 = vadd.f32 %v276, 1.0
    %v278 = vmul.f32 %v277, %v185
    %v279 = vand.u32 2147483647, %v185
    %vm280 = vcmp.lt.f32.partialorder %v279, 0.0004427343
    %v281 = vsel %vm280, %v278, %v275
    %v282 = vadd.f32 %v187, 1.0
    %v283 = vlog2.pop %v282
    %v284 = vmul.f32 %v283, 0.6931472
    %v285 = vmul.f32 -0.5, %v187
    %v286 = vadd.f32 %v285, 1.0
    %v287 = vmul.f32 %v286, %v187
    %v288 = vand.u32 2147483647, %v187
    %vm289 = vcmp.lt.f32.partialorder %v288, 0.0004427343
    %v290 = vsel %vm289, %v287, %v284
    %v291 = vadd.f32 %v189, 1.0
    %v292 = vlog2.pop %v291
    %v293 = vmul.f32 %v292, 0.6931472
    %v294 = vmul.f32 -0.5, %v189
    %v295 = vadd.f32 %v294, 1.0
    %v296 = vmul.f32 %v295, %v189
    %v297 = vand.u32 2147483647, %v189
    %vm298 = vcmp.lt.f32.partialorder %v297, 0.0004427343
    %v299 = vsel %vm298, %v296, %v293
    %v300 = vadd.f32 %v191, 1.0
    %v301 = vlog2.pop %v300
    %v302 = vmul.f32 %v301, 0.6931472
    %v303 = vmul.f32 -0.5, %v191
    %v304 = vadd.f32 %v303, 1.0
    %v305 = vmul.f32 %v304, %v191
    %v306 = vand.u32 2147483647, %v191
    %vm307 = vcmp.lt.f32.partialorder %v306, 0.0004427343
    %v308 = vsel %vm307, %v305, %v302
    %v309 = vadd.f32 %v193, 1.0
    %v310 = vlog2.pop %v309
    %v311 = vmul.f32 %v310, 0.6931472
    %v312 = vmul.f32 -0.5, %v193
    %v313 = vadd.f32 %v312, 1.0
    %v314 = vmul.f32 %v313, %v193
    %v315 = vand.u32 2147483647, %v193
    %vm316 = vcmp.lt.f32.partialorder %v315, 0.0004427343
    %v317 = vsel %vm316, %v314, %v311
    %v318 = vadd.f32 %v195, 1.0
    %v319 = vlog2.pop %v318
    %v320 = vmul.f32 %v319, 0.6931472
    %v321 = vmul.f32 -0.5, %v195
    %v322 = vadd.f32 %v321, 1.0
    %v323 = vmul.f32 %v322, %v195
    %v324 = vand.u32 2147483647, %v195
    %vm325 = vcmp.lt.f32.partialorder %v324, 0.0004427343
    %v326 = vsel %vm325, %v323, %v320
    %v327 = vadd.f32 %v197, 1.0
    %v328 = vlog2.pop %v327
    %v329 = vmul.f32 %v328, 0.6931472
    %v330 = vmul.f32 -0.5, %v197
    %v331 = vadd.f32 %v330, 1.0
    %v332 = vmul.f32 %v331, %v197
    %v333 = vand.u32 2147483647, %v197
    %vm334 = vcmp.lt.f32.partialorder %v333, 0.0004427343
    %v335 = vsel %vm334, %v332, %v329
    %v336 = vadd.f32 %v199, 1.0
    %v337 = vlog2.pop %v336
    %v338 = vmul.f32 %v337, 0.6931472
    %v339 = vmul.f32 -0.5, %v199
    %v340 = vadd.f32 %v339, 1.0
    %v341 = vmul.f32 %v340, %v199
    %v342 = vand.u32 2147483647, %v199
    %vm343 = vcmp.lt.f32.partialorder %v342, 0.0004427343
    %v344 = vsel %vm343, %v341, %v338
    %v345 = vadd.f32 %v201, 1.0
    %v346 = vlog2.pop %v345
    %v347 = vmul.f32 %v346, 0.6931472
    %v348 = vmul.f32 -0.5, %v201
    %v349 = vadd.f32 %v348, 1.0
    %v350 = vmul.f32 %v349, %v201
    %v351 = vand.u32 2147483647, %v201
    %vm352 = vcmp.lt.f32.partialorder %v351, 0.0004427343
    %v353 = vsel %vm352, %v350, %v347
    %v354 = vadd.f32 %v203, 1.0
    %v355 = vlog2.pop %v354
    %v356 = vmul.f32 %v355, 0.6931472
    %v357 = vmul.f32 -0.5, %v203
    %v358 = vadd.f32 %v357, 1.0
    %v359 = vmul.f32 %v358, %v203
    %v360 = vand.u32 2147483647, %v203
    %vm361 = vcmp.lt.f32.partialorder %v360, 0.0004427343
    %v362 = vsel %vm361, %v359, %v356
    %v363 = vadd.f32 %v205, 1.0
    %v364 = vlog2.pop %v363
    %v365 = vmul.f32 %v364, 0.6931472
    %v366 = vmul.f32 -0.5, %v205
    %v367 = vadd.f32 %v366, 1.0
    %v368 = vmul.f32 %v367, %v205
    %v369 = vand.u32 2147483647, %v205
    %vm370 = vcmp.lt.f32.partialorder %v369, 0.0004427343
    %v371 = vsel %vm370, %v368, %v365
    %v372 = vadd.f32 %v207, 1.0
    %v373 = vlog2.pop %v372
    %v374 = vmul.f32 %v373, 0.6931472
    %v375 = vmul.f32 -0.5, %v207
    %v376 = vadd.f32 %v375, 1.0
    %v377 = vmul.f32 %v376, %v207
    %v378 = vand.u32 2147483647, %v207
    %vm379 = vcmp.lt.f32.partialorder %v378, 0.0004427343
    %v380 = vsel %vm379, %v377, %v374
    %v381 = vadd.f32 %v209, 1.0
    %v382 = vlog2.pop %v381
    %v383 = vmul.f32 %v382, 0.6931472
    %v384 = vmul.f32 -0.5, %v209
    %v385 = vadd.f32 %v384, 1.0
    %v386 = vmul.f32 %v385, %v209
    %v387 = vand.u32 2147483647, %v209
    %vm388 = vcmp.lt.f32.partialorder %v387, 0.0004427343
    %v389 = vsel %vm388, %v386, %v383
    %v390 = vsub.f32 0.0, %v218
    %v391 = vsub.f32 0.0, %v227
    %v392 = vsub.f32 0.0, %v236
    %v393 = vsub.f32 0.0, %v245
    %v394 = vsub.f32 0.0, %v254
    %v395 = vsub.f32 0.0, %v263
    %v396 = vsub.f32 0.0, %v272
    %v397 = vsub.f32 0.0, %v281
    %v398 = vsub.f32 0.0, %v290
    %v399 = vsub.f32 0.0, %v299
    %v400 = vsub.f32 0.0, %v308
    %v401 = vsub.f32 0.0, %v317
    %v402 = vsub.f32 0.0, %v326
    %v403 = vsub.f32 0.0, %v335
    %v404 = vsub.f32 0.0, %v344
    %v405 = vsub.f32 0.0, %v353
    %v406 = vsub.f32 0.0, %v362
    %v407 = vsub.f32 0.0, %v371
    %v408 = vsub.f32 0.0, %v380
    %v409 = vsub.f32 0.0, %v389
    %v410 = vadd.f32 %v171, 1.0
    %v411 = vadd.f32 %v173, 1.0
    %v412 = vadd.f32 %v175, 1.0
    %v413 = vadd.f32 %v177, 1.0
    %v414 = vadd.f32 %v179, 1.0
    %v415 = vadd.f32 %v181, 1.0
    %v416 = vadd.f32 %v183, 1.0
    %v417 = vadd.f32 %v185, 1.0
    %v418 = vadd.f32 %v187, 1.0
    %v419 = vadd.f32 %v189, 1.0
    %v420 = vadd.f32 %v191, 1.0
    %v421 = vadd.f32 %v193, 1.0
    %v422 = vadd.f32 %v195, 1.0
    %v423 = vadd.f32 %v197, 1.0
    %v424 = vadd.f32 %v199, 1.0
    %v425 = vadd.f32 %v201, 1.0
    %v426 = vadd.f32 %v203, 1.0
    %v427 = vadd.f32 %v205, 1.0
    %v428 = vadd.f32 %v207, 1.0
    %v429 = vadd.f32 %v209, 1.0
    %v430 = vrcp.pop %v410
    %v431 = vrcp.pop %v411
    %v432 = vrcp.pop %v412
    %v433 = vrcp.pop %v413
    %v434 = vrcp.pop %v414
    %v435 = vrcp.pop %v415
    %v436 = vrcp.pop %v416
    %v437 = vrcp.pop %v417
    %v438 = vrcp.pop %v418
    %v439 = vrcp.pop %v419
    %v440 = vrcp.pop %v420
    %v441 = vrcp.pop %v421
    %v442 = vrcp.pop %v422
    %v443 = vrcp.pop %v423
    %v444 = vrcp.pop %v424
    %v445 = vrcp.pop %v425
    %v446 = vrcp.pop %v426
    %v447 = vrcp.pop %v427
    %v448 = vrcp.pop %v428
    %v449 = vrcp.pop %v429
    %v450 = vsub.f32 0.0, %v390
    %v451 = vsub.f32 0.0, %v391
    %v452 = vsub.f32 0.0, %v392
    %v453 = vsub.f32 0.0, %v393
    %v454 = vsub.f32 0.0, %v394
    %v455 = vsub.f32 0.0, %v395
    %v456 = vsub.f32 0.0, %v396
    %v457 = vsub.f32 0.0, %v397
    %v458 = vsub.f32 0.0, %v398
    %v459 = vsub.f32 0.0, %v399
    %v460 = vsub.f32 0.0, %v400
    %v461 = vsub.f32 0.0, %v401
    %v462 = vsub.f32 0.0, %v402
    %v463 = vsub.f32 0.0, %v403
    %v464 = vsub.f32 0.0, %v404
    %v465 = vsub.f32 0.0, %v405
    %v466 = vsub.f32 0.0, %v406
    %v467 = vsub.f32 0.0, %v407
    %v468 = vsub.f32 0.0, %v408
    %v469 = vsub.f32 0.0, %v409
    %v470 = vsub.f32 %v130, %v390
    %v471 = vsub.f32 %v131, %v391
    %v472 = vsub.f32 %v132, %v392
    %v473 = vsub.f32 %v133, %v393
    %v474 = vsub.f32 %v134, %v394
    %v475 = vsub.f32 %v135, %v395
    %v476 = vsub.f32 %v136, %v396
    %v477 = vsub.f32 %v137, %v397
    %v478 = vsub.f32 %v138, %v398
    %v479 = vsub.f32 %v139, %v399
    %v480 = vsub.f32 %v140, %v400
    %v481 = vsub.f32 %v141, %v401
    %v482 = vsub.f32 %v142, %v402
    %v483 = vsub.f32 %v143, %v403
    %v484 = vsub.f32 %v144, %v404
    %v485 = vsub.f32 %v145, %v405
    %v486 = vsub.f32 %v146, %v406
    %v487 = vsub.f32 %v147, %v407
    %v488 = vsub.f32 %v148, %v408
    %v489 = vsub.f32 %v149, %v409
    %v490 = vmul.f32 %v110, 0.25
    %v491 = vmul.f32 %v111, 0.25
    %v492 = vmul.f32 %v112, 0.25
    %v493 = vmul.f32 %v113, 0.25
    %v494 = vmul.f32 %v114, 0.25
    %v495 = vmul.f32 %v115, 0.25
    %v496 = vmul.f32 %v116, 0.25
    %v497 = vmul.f32 %v117, 0.25
    %v498 = vmul.f32 %v118, 0.25
    %v499 = vmul.f32 %v119, 0.25
    %v500 = vmul.f32 %v120, 0.25
    %v501 = vmul.f32 %v121, 0.25
    %v502 = vmul.f32 %v122, 0.25
    %v503 = vmul.f32 %v123, 0.25
    %v504 = vmul.f32 %v124, 0.25
    %v505 = vmul.f32 %v125, 0.25
    %v506 = vmul.f32 %v126, 0.25
    %v507 = vmul.f32 %v127, 0.25
    %v508 = vmul.f32 %v128, 0.25
    %v509 = vmul.f32 %v129, 0.25
    %v510 = vsub.f32 1.0, %v430
    %v511 = vsub.f32 1.0, %v431
    %v512 = vsub.f32 1.0, %v432
    %v513 = vsub.f32 1.0, %v433
    %v514 = vsub.f32 1.0, %v434
    %v515 = vsub.f32 1.0, %v435
    %v516 = vsub.f32 1.0, %v436
    %v517 = vsub.f32 1.0, %v437
    %v518 = vsub.f32 1.0, %v438
    %v519 = vsub.f32 1.0, %v439
    %v520 = vsub.f32 1.0, %v440
    %v521 = vsub.f32 1.0, %v441
    %v522 = vsub.f32 1.0, %v442
    %v523 = vsub.f32 1.0, %v443
    %v524 = vsub.f32 1.0, %v444
    %v525 = vsub.f32 1.0, %v445
    %v526 = vsub.f32 1.0, %v446
    %v527 = vsub.f32 1.0, %v447
    %v528 = vsub.f32 1.0, %v448
    %v529 = vsub.f32 1.0, %v449
    %v530 = vmul.f32 %v510, %v510
    %v531 = vmul.f32 %v511, %v511
    %v532 = vmul.f32 %v512, %v512
    %v533 = vmul.f32 %v513, %v513
    %v534 = vmul.f32 %v514, %v514
    %v535 = vmul.f32 %v515, %v515
    %v536 = vmul.f32 %v516, %v516
    %v537 = vmul.f32 %v517, %v517
    %v538 = vmul.f32 %v518, %v518
    %v539 = vmul.f32 %v519, %v519
    %v540 = vmul.f32 %v520, %v520
    %v541 = vmul.f32 %v521, %v521
    %v542 = vmul.f32 %v522, %v522
    %v543 = vmul.f32 %v523, %v523
    %v544 = vmul.f32 %v524, %v524
    %v545 = vmul.f32 %v525, %v525
    %v546 = vmul.f32 %v526, %v526
    %v547 = vmul.f32 %v527, %v527
    %v548 = vmul.f32 %v528, %v528
    %v549 = vmul.f32 %v529, %v529
    %v550 = vmul.f32 %v490, %v530
    %v551 = vmul.f32 %v491, %v531
    %v552 = vmul.f32 %v492, %v532
    %v553 = vmul.f32 %v493, %v533
    %v554 = vmul.f32 %v494, %v534
    %v555 = vmul.f32 %v495, %v535
    %v556 = vmul.f32 %v496, %v536
    %v557 = vmul.f32 %v497, %v537
    %v558 = vmul.f32 %v498, %v538
    %v559 = vmul.f32 %v499, %v539
    %v560 = vmul.f32 %v500, %v540
    %v561 = vmul.f32 %v501, %v541
    %v562 = vmul.f32 %v502, %v542
    %v563 = vmul.f32 %v503, %v543
    %v564 = vmul.f32 %v504, %v544
    %v565 = vmul.f32 %v505, %v545
    %v566 = vmul.f32 %v506, %v546
    %v567 = vmul.f32 %v507, %v547
    %v568 = vmul.f32 %v508, %v548
    %v569 = vmul.f32 %v509, %v549
    %v570 = vmul.f32 %v550, %v450
    %v571 = vmul.f32 %v551, %v451
    %v572 = vmul.f32 %v552, %v452
    %v573 = vmul.f32 %v553, %v453
    %v574 = vmul.f32 %v554, %v454
    %v575 = vmul.f32 %v555, %v455
    %v576 = vmul.f32 %v556, %v456
    %v577 = vmul.f32 %v557, %v457
    %v578 = vmul.f32 %v558, %v458
    %v579 = vmul.f32 %v559, %v459
    %v580 = vmul.f32 %v560, %v460
    %v581 = vmul.f32 %v561, %v461
    %v582 = vmul.f32 %v562, %v462
    %v583 = vmul.f32 %v563, %v463
    %v584 = vmul.f32 %v564, %v464
    %v585 = vmul.f32 %v565, %v465
    %v586 = vmul.f32 %v566, %v466
    %v587 = vmul.f32 %v567, %v467
    %v588 = vmul.f32 %v568, %v468
    %v589 = vmul.f32 %v569, %v469
    %v590 = vsub.f32 1.0, %v110
    %v591 = vsub.f32 1.0, %v111
    %v592 = vsub.f32 1.0, %v112
    %v593 = vsub.f32 1.0, %v113
    %v594 = vsub.f32 1.0, %v114
    %v595 = vsub.f32 1.0, %v115
    %v596 = vsub.f32 1.0, %v116
    %v597 = vsub.f32 1.0, %v117
    %v598 = vsub.f32 1.0, %v118
    %v599 = vsub.f32 1.0, %v119
    %v600 = vsub.f32 1.0, %v120
    %v601 = vsub.f32 1.0, %v121
    %v602 = vsub.f32 1.0, %v122
    %v603 = vsub.f32 1.0, %v123
    %v604 = vsub.f32 1.0, %v124
    %v605 = vsub.f32 1.0, %v125
    %v606 = vsub.f32 1.0, %v126
    %v607 = vsub.f32 1.0, %v127
    %v608 = vsub.f32 1.0, %v128
    %v609 = vsub.f32 1.0, %v129
    %v610 = vmul.f32 %v590, 0.75
    %v611 = vmul.f32 %v591, 0.75
    %v612 = vmul.f32 %v592, 0.75
    %v613 = vmul.f32 %v593, 0.75
    %v614 = vmul.f32 %v594, 0.75
    %v615 = vmul.f32 %v595, 0.75
    %v616 = vmul.f32 %v596, 0.75
    %v617 = vmul.f32 %v597, 0.75
    %v618 = vmul.f32 %v598, 0.75
    %v619 = vmul.f32 %v599, 0.75
    %v620 = vmul.f32 %v600, 0.75
    %v621 = vmul.f32 %v601, 0.75
    %v622 = vmul.f32 %v602, 0.75
    %v623 = vmul.f32 %v603, 0.75
    %v624 = vmul.f32 %v604, 0.75
    %v625 = vmul.f32 %v605, 0.75
    %v626 = vmul.f32 %v606, 0.75
    %v627 = vmul.f32 %v607, 0.75
    %v628 = vmul.f32 %v608, 0.75
    %v629 = vmul.f32 %v609, 0.75
    %v630 = vmul.f32 %v430, %v430
    %v631 = vmul.f32 %v431, %v431
    %v632 = vmul.f32 %v432, %v432
    %v633 = vmul.f32 %v433, %v433
    %v634 = vmul.f32 %v434, %v434
    %v635 = vmul.f32 %v435, %v435
    %v636 = vmul.f32 %v436, %v436
    %v637 = vmul.f32 %v437, %v437
    %v638 = vmul.f32 %v438, %v438
    %v639 = vmul.f32 %v439, %v439
    %v640 = vmul.f32 %v440, %v440
    %v641 = vmul.f32 %v441, %v441
    %v642 = vmul.f32 %v442, %v442
    %v643 = vmul.f32 %v443, %v443
    %v644 = vmul.f32 %v444, %v444
    %v645 = vmul.f32 %v445, %v445
    %v646 = vmul.f32 %v446, %v446
    %v647 = vmul.f32 %v447, %v447
    %v648 = vmul.f32 %v448, %v448
    %v649 = vmul.f32 %v449, %v449
    %v650 = vmul.f32 %v610, %v630
    %v651 = vmul.f32 %v611, %v631
    %v652 = vmul.f32 %v612, %v632
    %v653 = vmul.f32 %v613, %v633
    %v654 = vmul.f32 %v614, %v634
    %v655 = vmul.f32 %v615, %v635
    %v656 = vmul.f32 %v616, %v636
    %v657 = vmul.f32 %v617, %v637
    %v658 = vmul.f32 %v618, %v638
    %v659 = vmul.f32 %v619, %v639
    %v660 = vmul.f32 %v620, %v640
    %v661 = vmul.f32 %v621, %v641
    %v662 = vmul.f32 %v622, %v642
    %v663 = vmul.f32 %v623, %v643
    %v664 = vmul.f32 %v624, %v644
    %v665 = vmul.f32 %v625, %v645
    %v666 = vmul.f32 %v626, %v646
    %v667 = vmul.f32 %v627, %v647
    %v668 = vmul.f32 %v628, %v648
    %v669 = vmul.f32 %v629, %v649
    %v670 = vmul.f32 %v650, %v470
    %v671 = vmul.f32 %v651, %v471
    %v672 = vmul.f32 %v652, %v472
    %v673 = vmul.f32 %v653, %v473
    %v674 = vmul.f32 %v654, %v474
    %v675 = vmul.f32 %v655, %v475
    %v676 = vmul.f32 %v656, %v476
    %v677 = vmul.f32 %v657, %v477
    %v678 = vmul.f32 %v658, %v478
    %v679 = vmul.f32 %v659, %v479
    %v680 = vmul.f32 %v660, %v480
    %v681 = vmul.f32 %v661, %v481
    %v682 = vmul.f32 %v662, %v482
    %v683 = vmul.f32 %v663, %v483
    %v684 = vmul.f32 %v664, %v484
    %v685 = vmul.f32 %v665, %v485
    %v686 = vmul.f32 %v666, %v486
    %v687 = vmul.f32 %v667, %v487
    %v688 = vmul.f32 %v668, %v488
    %v689 = vmul.f32 %v669, %v489
    %v690 = vadd.f32 %v570, %v670
    %v691 = vadd.f32 %v571, %v671
    %v692 = vadd.f32 %v572, %v672
    %v693 = vadd.f32 %v573, %v673
    %v694 = vadd.f32 %v574, %v674
    %v695 = vadd.f32 %v575, %v675
    %v696 = vadd.f32 %v576, %v676
    %v697 = vadd.f32 %v577, %v677
    %v698 = vadd.f32 %v578, %v678
    %v699 = vadd.f32 %v579, %v679
    %v700 = vadd.f32 %v580, %v680
    %v701 = vadd.f32 %v581, %v681
    %v702 = vadd.f32 %v582, %v682
    %v703 = vadd.f32 %v583, %v683
    %v704 = vadd.f32 %v584, %v684
    %v705 = vadd.f32 %v585, %v685
    %v706 = vadd.f32 %v586, %v686
    %v707 = vadd.f32 %v587, %v687
    %v708 = vadd.f32 %v588, %v688
    %v709 = vadd.f32 %v589, %v689
    %v710 = vadd.f32 %v690, %v691
    %v711 = vadd.f32 %v710, %v692
    %v712 = vadd.f32 %v711, %v693
    %v713 = vadd.f32 %v712, %v694
    %v714 = vadd.f32 %v713, %v695
    %v715 = vadd.f32 %v714, %v696
    %v716 = vadd.f32 %v715, %v697
    %v717 = vadd.f32 %v716, %v698
    %v718 = vadd.f32 %v717, %v699
    %v719 = vadd.f32 %v718, %v700
    %v720 = vadd.f32 %v719, %v701
    %v721 = vadd.f32 %v720, %v702
    %v722 = vadd.f32 %v721, %v703
    %v723 = vadd.f32 %v722, %v704
    %v724 = vadd.f32 %v723, %v705
    %v725 = vadd.f32 %v724, %v706
    %v726 = vadd.f32 %v725, %v707
    %v727 = vadd.f32 %v726, %v708
    %v728 = vadd.f32 %v727, %v709
    %729 = vadd.xlane.f32.xlu0 %v728
    %v730 = vpop.xlane.xlu0 %729
    %v731 = vrot.slane %v730, 4
    %v732 = vadd.f32 %v730, %v731
    %v733 = vrot.slane %v732, 2
    %v734 = vadd.f32 %v732, %v733
    %v735 = vrot.slane %v734, 1
    %v736 = vadd.f32 %v734, %v735
    %s737 = vtos %v736
    %v738 = vld [vmem:[%s12] sm:$0x3]
    %v739 = vld [vmem:[%s8] sm:$0x3]
    %v740 = vld [vmem:[%s8 + $0x2] sm:$0x3]
    %v741 = vld [vmem:[%s8 + $0x4] sm:$0x3]
    %v742 = vld [vmem:[%s8 + $0x6] sm:$0x3]
    %v743 = vld [vmem:[%s9] sm:$0x3]
    %v744 = vld [vmem:[%s9 + $0x2] sm:$0x3]
    %v745 = vld [vmem:[%s9 + $0x4] sm:$0x3]
    %v746 = vld [vmem:[%s9 + $0x6] sm:$0x3]
    %v747 = vmin.f32 %v739, %v743
    %v748 = vmin.f32 %v740, %v744
    %v749 = vmin.f32 %v741, %v745
    %v750 = vmin.f32 %v742, %v746
    %v751 = vmax.f32 %v739, %v743
    %v752 = vmax.f32 %v740, %v744
    %v753 = vmax.f32 %v741, %v745
    %v754 = vmax.f32 %v742, %v746
    %v755 = vadd.f32 %v739, %v741
    %v756 = vadd.f32 %v740, %v742
    %v757 = vmul.f32 %v755, %v756
    %v758 = vadd.f32 %v743, %v745
    %v759 = vadd.f32 %v744, %v746
    %v760 = vmul.f32 %v758, %v759
    %v761 = vadd.f32 %v747, %v749
    %v762 = vadd.f32 %v748, %v750
    %v763 = vmul.f32 %v761, %v762
    %v764 = vadd.f32 %v751, %v753
    %v765 = vadd.f32 %v752, %v754
    %v766 = vmul.f32 %v764, %v765
    %v767 = vadd.f32 %v757, %v760
    %v768 = vsub.f32 %v767, %v763
    %v769 = vmax.f32 %v768, 1e-06
    %v770 = vrcp.pop %v769
    %v771 = vmul.f32 %v763, %v770
    %v772 = vsub.f32 %v766, %v768
    %v773 = vmax.f32 %v766, 1e-06
    %v774 = vrcp.pop %v773
    %v775 = vmul.f32 %v772, %v774
    %v776 = vsub.f32 %v771, %v775
    %v777 = vsub.f32 1.0, %v776
    %v778 = vmul.f32 %v738, %v777
    %vm779 = vcmask 1041408
    %v780 = vsel %vm779, %v778, 0.0
    %781 = vadd.xlane.f32.xlu0 %v780
    %v782 = vpop.xlane.xlu0 %781
    %v783 = vrot.slane %v782, 4
    %v784 = vadd.f32 %v782, %v783
    %v785 = vrot.slane %v784, 2
    %v786 = vadd.f32 %v784, %v785
    %v787 = vrot.slane %v786, 1
    %v788 = vadd.f32 %v786, %v787
    %s789 = vtos %v788
    %v790 = vld [vmem:[%s10] sm:$0x3]
    %v791 = vld [vmem:[%s11] sm:$0x3]
    %v792 = vsub.f32 1.0, %v791
    %v793 = vmul.f32 %v792, %v790
    %v794 = vsub.f32 0.0, %v790
    %v795 = vmax.f32 %v794, 0.0
    %vm796 = vcmp.ne.f32.partialorder %v794, %v794
    %v797 = vadd.f32 %v794, 0.0
    %v798 = vand.u32 2147483647, %v794
    %v799 = vsub.f32 0.0, %v798
    %v800 = vmul.f32 %v799, 1.442695
    %v801 = vpow.pop %v800
    %v802 = vadd.f32 %v801, 1.0
    %v803 = vlog2.pop %v802
    %v804 = vmul.f32 %v803, 0.6931472
    %v805 = vmul.f32 -0.5, %v801
    %v806 = vadd.f32 %v805, 1.0
    %v807 = vmul.f32 %v806, %v801
    %v808 = vand.u32 2147483647, %v801
    %vm809 = vcmp.lt.f32.partialorder %v808, 0.0004427343
    %v810 = vsel %vm809, %v807, %v804
    %v811 = vadd.f32 %v795, %v810
    %v812 = vsel %vm796, %v797, %v811
    %v813 = vsub.f32 0.0, %v812
    %v814 = vsub.f32 %v793, %v813
    %v815 = vmul.f32 %v738, %v814
    %v816 = vsel %vm779, %v815, 0.0
    %817 = vadd.xlane.f32.xlu0 %v816
    %v818 = vpop.xlane.xlu0 %817
    %v819 = vrot.slane %v818, 4
    %v820 = vadd.f32 %v818, %v819
    %v821 = vrot.slane %v820, 2
    %v822 = vadd.f32 %v820, %v821
    %v823 = vrot.slane %v822, 1
    %v824 = vadd.f32 %v822, %v823
    %s825 = vtos %v824
    %s826 = scalar_lea.smem [#allocation9], 0
    %827 = sst [smem:[%s826]] %s737
    %s828 = scalar_lea.smem [#allocation9], 1
    %829 = sst [smem:[%s828]] %s789
    %s830 = scalar_lea.smem [#allocation9], 2
    %831 = sst [smem:[%s830]] %s825
    %v832 = vsel %vm779, %v738, 0.0
    %833 = vadd.xlane.f32.xlu0 %v832
    %v834 = vpop.xlane.xlu0 %833
    %v835 = vrot.slane %v834, 4
    %v836 = vadd.f32 %v834, %v835
    %v837 = vrot.slane %v836, 2
    %v838 = vadd.f32 %v836, %v837
    %v839 = vrot.slane %v838, 1
    %v840 = vadd.f32 %v838, %v839
    %s841 = vtos %v840
    %s842 = scalar_lea.smem [#allocation9], 3
    %843 = sst [smem:[%s842]] %s841
    %v844 = vlaneseq
    %v845 = vshrl.u32 %v844, 7
    %v846 = vadd.s32 %v845, 8
    %v847 = vlaneseq
    %v848 = vand.u32 %v847, 127
    %v849 = vld [vmem:[%s4] sm:$0xff]
    %v850 = vld [vmem:[%s4 + $0x8] sm:$0xff]
    %s851 = scalar_lea.vmem %s4, 16
    %v852 = vld [vmem:[%s851] sm:$0xff]
    %v853 = vld [vmem:[%s851 + $0x8] sm:$0xff]
    %v854 = vld [vmem:[%s3] sm:$0xff]
    %v855 = vld [vmem:[%s3 + $0x8] sm:$0xff]
    %v856 = vtanh.pop %v854
    %v857 = vtanh.pop %v855
    %v858 = vadd.f32 %v856, %v849
    %v859 = vadd.f32 %v857, %v850
    %s860 = scalar_lea.vmem %s3, 16
    %v861 = vld [vmem:[%s860] sm:$0xff]
    %v862 = vld [vmem:[%s860 + $0x8] sm:$0xff]
    %v863 = vtanh.pop %v861
    %v864 = vtanh.pop %v862
    %v865 = vadd.f32 %v863, %v852
    %v866 = vadd.f32 %v864, %v853
    %s867 = scalar_lea.vmem %s3, 32
    %v868 = vld [vmem:[%s867] sm:$0xff]
    %v869 = vld [vmem:[%s867 + $0x8] sm:$0xff]
    %s870 = scalar_lea.vmem %s3, 48
    %v871 = vld [vmem:[%s870] sm:$0xff]
    %v872 = vld [vmem:[%s870 + $0x8] sm:$0xff]
    %v873 = vtanh.pop %v871
    %v874 = vtanh.pop %v872
    %v875 = vadd.f32 %v873, %v849
    %v876 = vadd.f32 %v874, %v850
    %s877 = scalar_lea.vmem %s3, 64
    %v878 = vld [vmem:[%s877] sm:$0xff]
    %v879 = vld [vmem:[%s877 + $0x8] sm:$0xff]
    %v880 = vtanh.pop %v878
    %v881 = vtanh.pop %v879
    %v882 = vadd.f32 %v880, %v852
    %v883 = vadd.f32 %v881, %v853
    %s884 = scalar_lea.vmem %s3, 80
    %v885 = vld [vmem:[%s884] sm:$0xff]
    %v886 = vld [vmem:[%s884 + $0x8] sm:$0xff]
    %v887 = vld [vmem:[%s5] sm:$0xff]
    %v888 = vld [vmem:[%s5 + $0x8] sm:$0xff]
    %s889 = sld [smem:[#allocation2]]
    %v890 = vstv %s889
    %vm891 = vcmp.eq.s32.totalorder %v887, %v890
    %vm892 = vcmp.eq.s32.totalorder %v888, %v890
    %v893 = vsel %vm891, 1, 0
    %v894 = vsel %vm892, 1, 0
    %v895 = vcvt.s32.f32 %v893
    %v896 = vcvt.s32.f32 %v894
    %v897 = vadd.f32 %v895, %v896
    %898 = vadd.xlane.f32.xlu0 %v897
    %v899 = vpop.xlane.xlu0 %898
    %v900 = vrot.slane %v899, 4
    %v901 = vadd.f32 %v899, %v900
    %v902 = vrot.slane %v901, 2
    %v903 = vadd.f32 %v901, %v902
    %v904 = vrot.slane %v903, 1
    %v905 = vadd.f32 %v903, %v904
    %s906 = vtos %v905
    %s907 = smax.f32 %s906, 1.0
    %v908 = vmul.f32 %v868, %v895
    %v909 = vmul.f32 %v869, %v896
    %v910 = vadd.f32 %v908, %v909
    %911 = vadd.xlane.f32.xlu0 %v910
    %v912 = vpop.xlane.xlu0 %911
    %v913 = vrot.slane %v912, 4
    %v914 = vadd.f32 %v912, %v913
    %v915 = vrot.slane %v914, 2
    %v916 = vadd.f32 %v914, %v915
    %v917 = vrot.slane %v916, 1
    %v918 = vadd.f32 %v916, %v917
    %s919 = vtos %v918
    %s920 = sld [smem:[#allocation2 + $0x1]]
    %v921 = vstv %s920
    %vm922 = vcmp.eq.s32.totalorder %v887, %v921
    %vm923 = vcmp.eq.s32.totalorder %v888, %v921
    %v924 = vsel %vm922, 1, 0
    %v925 = vsel %vm923, 1, 0
    %v926 = vcvt.s32.f32 %v924
    %v927 = vcvt.s32.f32 %v925
    %v928 = vadd.f32 %v926, %v927
    %929 = vadd.xlane.f32.xlu0 %v928
    %v930 = vpop.xlane.xlu0 %929
    %v931 = vrot.slane %v930, 4
    %v932 = vadd.f32 %v930, %v931
    %v933 = vrot.slane %v932, 2
    %v934 = vadd.f32 %v932, %v933
    %v935 = vrot.slane %v934, 1
    %v936 = vadd.f32 %v934, %v935
    %s937 = vtos %v936
    %s938 = smax.f32 %s937, 1.0
    %v939 = vmul.f32 %v868, %v926
    %v940 = vmul.f32 %v869, %v927
    %v941 = vadd.f32 %v939, %v940
    %942 = vadd.xlane.f32.xlu0 %v941
    %v943 = vpop.xlane.xlu0 %942
    %v944 = vrot.slane %v943, 4
    %v945 = vadd.f32 %v943, %v944
    %v946 = vrot.slane %v945, 2
    %v947 = vadd.f32 %v945, %v946
    %v948 = vrot.slane %v947, 1
    %v949 = vadd.f32 %v947, %v948
    %s950 = vtos %v949
    %s951 = scalar_lea.vmem %s5, 16
    %v952 = vld [vmem:[%s951] sm:$0xff]
    %v953 = vld [vmem:[%s951 + $0x8] sm:$0xff]
    %s954 = sld [smem:[#allocation2 + $0x80]]
    %v955 = vstv %s954
    %vm956 = vcmp.eq.s32.totalorder %v952, %v955
    %vm957 = vcmp.eq.s32.totalorder %v953, %v955
    %v958 = vsel %vm956, 1, 0
    %v959 = vsel %vm957, 1, 0
    %v960 = vcvt.s32.f32 %v958
    %v961 = vcvt.s32.f32 %v959
    %v962 = vadd.f32 %v960, %v961
    %963 = vadd.xlane.f32.xlu0 %v962
    %v964 = vpop.xlane.xlu0 %963
    %v965 = vrot.slane %v964, 4
    %v966 = vadd.f32 %v964, %v965
    %v967 = vrot.slane %v966, 2
    %v968 = vadd.f32 %v966, %v967
    %v969 = vrot.slane %v968, 1
    %v970 = vadd.f32 %v968, %v969
    %s971 = vtos %v970
    %s972 = smax.f32 %s971, 1.0
    %v973 = vmul.f32 %v885, %v960
    %v974 = vmul.f32 %v886, %v961
    %v975 = vadd.f32 %v973, %v974
    %976 = vadd.xlane.f32.xlu0 %v975
    %v977 = vpop.xlane.xlu0 %976
    %v978 = vrot.slane %v977, 4
    %v979 = vadd.f32 %v977, %v978
    %v980 = vrot.slane %v979, 2
    %v981 = vadd.f32 %v979, %v980
    %v982 = vrot.slane %v981, 1
    %v983 = vadd.f32 %v981, %v982
    %s984 = vtos %v983
    %s985 = sld [smem:[#allocation2 + $0x81]]
    %v986 = vstv %s985
    %vm987 = vcmp.eq.s32.totalorder %v952, %v986
    %vm988 = vcmp.eq.s32.totalorder %v953, %v986
    %v989 = vsel %vm987, 1, 0
    %v990 = vsel %vm988, 1, 0
    %v991 = vcvt.s32.f32 %v989
    %v992 = vcvt.s32.f32 %v990
    %v993 = vadd.f32 %v991, %v992
    %994 = vadd.xlane.f32.xlu0 %v993
    %v995 = vpop.xlane.xlu0 %994
    %v996 = vrot.slane %v995, 4
    %v997 = vadd.f32 %v995, %v996
    %v998 = vrot.slane %v997, 2
    %v999 = vadd.f32 %v997, %v998
    %v1000 = vrot.slane %v999, 1
    %v1001 = vadd.f32 %v999, %v1000
    %s1002 = vtos %v1001
    %s1003 = smax.f32 %s1002, 1.0
    %v1004 = vmul.f32 %v885, %v991
    %v1005 = vmul.f32 %v886, %v992
    %v1006 = vadd.f32 %v1004, %v1005
    %1007 = vadd.xlane.f32.xlu0 %v1006
    %v1008 = vpop.xlane.xlu0 %1007
    %v1009 = vrot.slane %v1008, 4
    %v1010 = vadd.f32 %v1008, %v1009
    %v1011 = vrot.slane %v1010, 2
    %v1012 = vadd.f32 %v1010, %v1011
    %v1013 = vrot.slane %v1012, 1
    %v1014 = vadd.f32 %v1012, %v1013
    %s1015 = vtos %v1014
    %v1016 = vstv %s907
    %v1017 = vrcp.pop %v1016
    %s1018 = vtos %v1017
    %s1019 = smul.f32 %s919, %s1018
    %v1020 = vstv %s1019
    %v1021 = vsub.f32 %v868, %v1020
    %v1022 = vsub.f32 %v869, %v1020
    %v1023 = vmul.f32 %v1021, %v895
    %v1024 = vmul.f32 %v1022, %v896
    %v1025 = vmul.f32 %v1023, %v1023
    %v1026 = vmul.f32 %v1024, %v1024
    %v1027 = vadd.f32 %v1025, %v1026
    %1028 = vadd.xlane.f32.xlu0 %v1027
    %v1029 = vpop.xlane.xlu0 %1028
    %v1030 = vrot.slane %v1029, 4
    %v1031 = vadd.f32 %v1029, %v1030
    %v1032 = vrot.slane %v1031, 2
    %v1033 = vadd.f32 %v1031, %v1032
    %v1034 = vrot.slane %v1033, 1
    %v1035 = vadd.f32 %v1033, %v1034
    %s1036 = vtos %v1035
    %v1037 = vstv %s907
    %v1038 = vrcp.pop %v1037
    %s1039 = vtos %v1038
    %s1040 = smul.f32 %s1036, %s1039
    %v1041 = vstv %s1019
    %v1042 = vmul.f32 %v1041, 1.442695
    %v1043 = vpow.pop %v1042
    %s1044 = vtos %v1043
    %s1045 = sld [smem:[#allocation7]]
    %s1046 = sld [smem:[#allocation7 + $0x1]]
    %v1047 = vstv %s1045
    %v1048 = vsub.f32 %v858, %v1047
    %v1049 = vsub.f32 %v859, %v1047
    %v1050 = vmul.f32 %v1048, %v1048
    %v1051 = vmul.f32 %v1049, %v1049
    %v1052 = vstv %s1046
    %v1053 = vsub.f32 %v865, %v1052
    %v1054 = vsub.f32 %v866, %v1052
    %v1055 = vmul.f32 %v1053, %v1053
    %v1056 = vmul.f32 %v1054, %v1054
    %v1057 = vadd.f32 %v1050, %v1055
    %v1058 = vadd.f32 %v1051, %v1056
    %v1059 = vsub.f32 0.0, %v1057
    %v1060 = vsub.f32 0.0, %v1058
    %v1061 = vstv %s1044
    %v1062 = vmul.f32 %v1059, %v1061
    %v1063 = vmul.f32 %v1060, %v1061
    %v1064 = vmul.f32 %v1062, 1.442695
    %v1065 = vpow.pop %v1064
    %v1066 = vmul.f32 %v1063, 1.442695
    %v1067 = vpow.pop %v1066
    %s1068 = sld [smem:[#allocation5]]
    %s1069 = sld [smem:[#allocation5 + $0x1]]
    %s1070 = sld [smem:[#allocation5 + $0x2]]
    %s1071 = sld [smem:[#allocation5 + $0x3]]
    %v1072 = vstv %s1068
    %vm1073 = vcmp.ge.s32.totalorder %v845, %v1072
    %vm1074 = vcmp.ge.s32.totalorder %v846, %v1072
    %v1075 = vstv %s1070
    %vm1076 = vcmp.lt.s32.totalorder %v845, %v1075
    %vm1077 = vcmp.lt.s32.totalorder %v846, %v1075
    %vm1078 = vmand %vm1073, %vm1076
    %vm1079 = vmand %vm1074, %vm1077
    %v1080 = vstv %s1069
    %vm1081 = vcmp.ge.s32.totalorder %v848, %v1080
    %vm1082 = vmand %vm1078, %vm1081
    %vm1083 = vmand %vm1079, %vm1081
    %v1084 = vstv %s1071
    %vm1085 = vcmp.lt.s32.totalorder %v848, %v1084
    %vm1086 = vmand %vm1082, %vm1085
    %vm1087 = vmand %vm1083, %vm1085
    %v1088 = vmul.f32 %v1065, 2.0
    %v1089 = vmul.f32 %v1067, 2.0
    %v1090 = vsub.f32 %v1088, 1.0
    %v1091 = vsub.f32 %v1089, 1.0
    %v1092 = vsel %vm1086, %v1090, -1e+09
    %v1093 = vsel %vm1087, %v1091, -1e+09
    %1094 = vst [vmem:[%s13] sm:$0xff] %v1092
    %1095 = vst [vmem:[%s13 + $0x8] sm:$0xff] %v1093
    %v1096 = vsel %vm1086, %v895, 0.0
    %v1097 = vsel %vm1087, %v896, 0.0
    %1098 = vst [vmem:[%s14] sm:$0xff] %v1096
    %1099 = vst [vmem:[%s14 + $0x8] sm:$0xff] %v1097
    %s1100 = scalar_lea.smem [#allocation8], 0
    %1101 = sst [smem:[%s1100]] %s1040
    %v1102 = vstv %s938
    %v1103 = vrcp.pop %v1102
    %s1104 = vtos %v1103
    %s1105 = smul.f32 %s950, %s1104
    %v1106 = vstv %s1105
    %v1107 = vsub.f32 %v868, %v1106
    %v1108 = vsub.f32 %v869, %v1106
    %v1109 = vmul.f32 %v1107, %v926
    %v1110 = vmul.f32 %v1108, %v927
    %v1111 = vmul.f32 %v1109, %v1109
    %v1112 = vmul.f32 %v1110, %v1110
    %v1113 = vadd.f32 %v1111, %v1112
    %1114 = vadd.xlane.f32.xlu0 %v1113
    %v1115 = vpop.xlane.xlu0 %1114
    %v1116 = vrot.slane %v1115, 4
    %v1117 = vadd.f32 %v1115, %v1116
    %v1118 = vrot.slane %v1117, 2
    %v1119 = vadd.f32 %v1117, %v1118
    %v1120 = vrot.slane %v1119, 1
    %v1121 = vadd.f32 %v1119, %v1120
    %s1122 = vtos %v1121
    %v1123 = vstv %s938
    %v1124 = vrcp.pop %v1123
    %s1125 = vtos %v1124
    %s1126 = smul.f32 %s1122, %s1125
    %v1127 = vstv %s1105
    %v1128 = vmul.f32 %v1127, 1.442695
    %v1129 = vpow.pop %v1128
    %s1130 = vtos %v1129
    %s1131 = sld [smem:[#allocation7 + $0x80]]
    %s1132 = sld [smem:[#allocation7 + $0x81]]
    %v1133 = vstv %s1131
    %v1134 = vsub.f32 %v858, %v1133
    %v1135 = vsub.f32 %v859, %v1133
    %v1136 = vmul.f32 %v1134, %v1134
    %v1137 = vmul.f32 %v1135, %v1135
    %v1138 = vstv %s1132
    %v1139 = vsub.f32 %v865, %v1138
    %v1140 = vsub.f32 %v866, %v1138
    %v1141 = vmul.f32 %v1139, %v1139
    %v1142 = vmul.f32 %v1140, %v1140
    %v1143 = vadd.f32 %v1136, %v1141
    %v1144 = vadd.f32 %v1137, %v1142
    %v1145 = vsub.f32 0.0, %v1143
    %v1146 = vsub.f32 0.0, %v1144
    %v1147 = vstv %s1130
    %v1148 = vmul.f32 %v1145, %v1147
    %v1149 = vmul.f32 %v1146, %v1147
    %v1150 = vmul.f32 %v1148, 1.442695
    %v1151 = vpow.pop %v1150
    %v1152 = vmul.f32 %v1149, 1.442695
    %v1153 = vpow.pop %v1152
    %s1154 = sld [smem:[#allocation5 + $0x80]]
    %s1155 = sld [smem:[#allocation5 + $0x81]]
    %s1156 = sld [smem:[#allocation5 + $0x82]]
    %s1157 = sld [smem:[#allocation5 + $0x83]]
    %v1158 = vstv %s1154
    %vm1159 = vcmp.ge.s32.totalorder %v845, %v1158
    %vm1160 = vcmp.ge.s32.totalorder %v846, %v1158
    %v1161 = vstv %s1156
    %vm1162 = vcmp.lt.s32.totalorder %v845, %v1161
    %vm1163 = vcmp.lt.s32.totalorder %v846, %v1161
    %vm1164 = vmand %vm1159, %vm1162
    %vm1165 = vmand %vm1160, %vm1163
    %v1166 = vstv %s1155
    %vm1167 = vcmp.ge.s32.totalorder %v848, %v1166
    %vm1168 = vmand %vm1164, %vm1167
    %vm1169 = vmand %vm1165, %vm1167
    %v1170 = vstv %s1157
    %vm1171 = vcmp.lt.s32.totalorder %v848, %v1170
    %vm1172 = vmand %vm1168, %vm1171
    %vm1173 = vmand %vm1169, %vm1171
    %v1174 = vmul.f32 %v1151, 2.0
    %v1175 = vmul.f32 %v1153, 2.0
    %v1176 = vsub.f32 %v1174, 1.0
    %v1177 = vsub.f32 %v1175, 1.0
    %v1178 = vsel %vm1172, %v1176, -1e+09
    %v1179 = vsel %vm1173, %v1177, -1e+09
    %s1180 = scalar_lea.vmem %s13, 16
    %1181 = vst [vmem:[%s1180] sm:$0xff] %v1178
    %1182 = vst [vmem:[%s1180 + $0x8] sm:$0xff] %v1179
    %v1183 = vsel %vm1172, %v926, 0.0
    %v1184 = vsel %vm1173, %v927, 0.0
    %s1185 = scalar_lea.vmem %s14, 16
    %1186 = vst [vmem:[%s1185] sm:$0xff] %v1183
    %1187 = vst [vmem:[%s1185 + $0x8] sm:$0xff] %v1184
    %s1188 = scalar_lea.smem [#allocation8], 1
    %1189 = sst [smem:[%s1188]] %s1126
    %v1190 = vstv %s972
    %v1191 = vrcp.pop %v1190
    %s1192 = vtos %v1191
    %s1193 = smul.f32 %s984, %s1192
    %v1194 = vstv %s1193
    %v1195 = vsub.f32 %v885, %v1194
    %v1196 = vsub.f32 %v886, %v1194
    %v1197 = vmul.f32 %v1195, %v960
    %v1198 = vmul.f32 %v1196, %v961
    %v1199 = vmul.f32 %v1197, %v1197
    %v1200 = vmul.f32 %v1198, %v1198
    %v1201 = vadd.f32 %v1199, %v1200
    %1202 = vadd.xlane.f32.xlu0 %v1201
    %v1203 = vpop.xlane.xlu0 %1202
    %v1204 = vrot.slane %v1203, 4
    %v1205 = vadd.f32 %v1203, %v1204
    %v1206 = vrot.slane %v1205, 2
    %v1207 = vadd.f32 %v1205, %v1206
    %v1208 = vrot.slane %v1207, 1
    %v1209 = vadd.f32 %v1207, %v1208
    %s1210 = vtos %v1209
    %v1211 = vstv %s972
    %v1212 = vrcp.pop %v1211
    %s1213 = vtos %v1212
    %s1214 = smul.f32 %s1210, %s1213
    %v1215 = vstv %s1193
    %v1216 = vmul.f32 %v1215, 1.442695
    %v1217 = vpow.pop %v1216
    %s1218 = vtos %v1217
    %s1219 = sld [smem:[#allocation7 + $0x100]]
    %s1220 = sld [smem:[#allocation7 + $0x101]]
    %v1221 = vstv %s1219
    %v1222 = vsub.f32 %v875, %v1221
    %v1223 = vsub.f32 %v876, %v1221
    %v1224 = vmul.f32 %v1222, %v1222
    %v1225 = vmul.f32 %v1223, %v1223
    %v1226 = vstv %s1220
    %v1227 = vsub.f32 %v882, %v1226
    %v1228 = vsub.f32 %v883, %v1226
    %v1229 = vmul.f32 %v1227, %v1227
    %v1230 = vmul.f32 %v1228, %v1228
    %v1231 = vadd.f32 %v1224, %v1229
    %v1232 = vadd.f32 %v1225, %v1230
    %v1233 = vsub.f32 0.0, %v1231
    %v1234 = vsub.f32 0.0, %v1232
    %v1235 = vstv %s1218
    %v1236 = vmul.f32 %v1233, %v1235
    %v1237 = vmul.f32 %v1234, %v1235
    %v1238 = vmul.f32 %v1236, 1.442695
    %v1239 = vpow.pop %v1238
    %v1240 = vmul.f32 %v1237, 1.442695
    %v1241 = vpow.pop %v1240
    %s1242 = sld [smem:[#allocation5 + $0x100]]
    %s1243 = sld [smem:[#allocation5 + $0x101]]
    %s1244 = sld [smem:[#allocation5 + $0x102]]
    %s1245 = sld [smem:[#allocation5 + $0x103]]
    %v1246 = vstv %s1242
    %vm1247 = vcmp.ge.s32.totalorder %v845, %v1246
    %vm1248 = vcmp.ge.s32.totalorder %v846, %v1246
    %v1249 = vstv %s1244
    %vm1250 = vcmp.lt.s32.totalorder %v845, %v1249
    %vm1251 = vcmp.lt.s32.totalorder %v846, %v1249
    %vm1252 = vmand %vm1247, %vm1250
    %vm1253 = vmand %vm1248, %vm1251
    %v1254 = vstv %s1243
    %vm1255 = vcmp.ge.s32.totalorder %v848, %v1254
    %vm1256 = vmand %vm1252, %vm1255
    %vm1257 = vmand %vm1253, %vm1255
    %v1258 = vstv %s1245
    %vm1259 = vcmp.lt.s32.totalorder %v848, %v1258
    %vm1260 = vmand %vm1256, %vm1259
    %vm1261 = vmand %vm1257, %vm1259
    %v1262 = vmul.f32 %v1239, 2.0
    %v1263 = vmul.f32 %v1241, 2.0
    %v1264 = vsub.f32 %v1262, 1.0
    %v1265 = vsub.f32 %v1263, 1.0
    %v1266 = vsel %vm1260, %v1264, -1e+09
    %v1267 = vsel %vm1261, %v1265, -1e+09
    %s1268 = scalar_lea.vmem %s13, 32
    %1269 = vst [vmem:[%s1268] sm:$0xff] %v1266
    %1270 = vst [vmem:[%s1268 + $0x8] sm:$0xff] %v1267
    %v1271 = vsel %vm1260, %v960, 0.0
    %v1272 = vsel %vm1261, %v961, 0.0
    %s1273 = scalar_lea.vmem %s14, 32
    %1274 = vst [vmem:[%s1273] sm:$0xff] %v1271
    %1275 = vst [vmem:[%s1273 + $0x8] sm:$0xff] %v1272
    %s1276 = scalar_lea.smem [#allocation8], 128
    %1277 = sst [smem:[%s1276]] %s1214
    %v1278 = vstv %s1003
    %v1279 = vrcp.pop %v1278
    %s1280 = vtos %v1279
    %s1281 = smul.f32 %s1015, %s1280
    %v1282 = vstv %s1281
    %v1283 = vsub.f32 %v885, %v1282
    %v1284 = vsub.f32 %v886, %v1282
    %v1285 = vmul.f32 %v1283, %v991
    %v1286 = vmul.f32 %v1284, %v992
    %v1287 = vmul.f32 %v1285, %v1285
    %v1288 = vmul.f32 %v1286, %v1286
    %v1289 = vadd.f32 %v1287, %v1288
    %1290 = vadd.xlane.f32.xlu0 %v1289
    %v1291 = vpop.xlane.xlu0 %1290
    %v1292 = vrot.slane %v1291, 4
    %v1293 = vadd.f32 %v1291, %v1292
    %v1294 = vrot.slane %v1293, 2
    %v1295 = vadd.f32 %v1293, %v1294
    %v1296 = vrot.slane %v1295, 1
    %v1297 = vadd.f32 %v1295, %v1296
    %s1298 = vtos %v1297
    %v1299 = vstv %s1003
    %v1300 = vrcp.pop %v1299
    %s1301 = vtos %v1300
    %s1302 = smul.f32 %s1298, %s1301
    %v1303 = vstv %s1281
    %v1304 = vmul.f32 %v1303, 1.442695
    %v1305 = vpow.pop %v1304
    %s1306 = vtos %v1305
    %s1307 = sld [smem:[#allocation7 + $0x180]]
    %s1308 = sld [smem:[#allocation7 + $0x181]]
    %v1309 = vstv %s1307
    %v1310 = vsub.f32 %v875, %v1309
    %v1311 = vsub.f32 %v876, %v1309
    %v1312 = vmul.f32 %v1310, %v1310
    %v1313 = vmul.f32 %v1311, %v1311
    %v1314 = vstv %s1308
    %v1315 = vsub.f32 %v882, %v1314
    %v1316 = vsub.f32 %v883, %v1314
    %v1317 = vmul.f32 %v1315, %v1315
    %v1318 = vmul.f32 %v1316, %v1316
    %v1319 = vadd.f32 %v1312, %v1317
    %v1320 = vadd.f32 %v1313, %v1318
    %v1321 = vsub.f32 0.0, %v1319
    %v1322 = vsub.f32 0.0, %v1320
    %v1323 = vstv %s1306
    %v1324 = vmul.f32 %v1321, %v1323
    %v1325 = vmul.f32 %v1322, %v1323
    %v1326 = vmul.f32 %v1324, 1.442695
    %v1327 = vpow.pop %v1326
    %v1328 = vmul.f32 %v1325, 1.442695
    %v1329 = vpow.pop %v1328
    %s1330 = sld [smem:[#allocation5 + $0x180]]
    %s1331 = sld [smem:[#allocation5 + $0x181]]
    %s1332 = sld [smem:[#allocation5 + $0x182]]
    %s1333 = sld [smem:[#allocation5 + $0x183]]
    %v1334 = vstv %s1330
    %vm1335 = vcmp.ge.s32.totalorder %v845, %v1334
    %vm1336 = vcmp.ge.s32.totalorder %v846, %v1334
    %v1337 = vstv %s1332
    %vm1338 = vcmp.lt.s32.totalorder %v845, %v1337
    %vm1339 = vcmp.lt.s32.totalorder %v846, %v1337
    %vm1340 = vmand %vm1335, %vm1338
    %vm1341 = vmand %vm1336, %vm1339
    %v1342 = vstv %s1331
    %vm1343 = vcmp.ge.s32.totalorder %v848, %v1342
    %vm1344 = vmand %vm1340, %vm1343
    %vm1345 = vmand %vm1341, %vm1343
    %v1346 = vstv %s1333
    %vm1347 = vcmp.lt.s32.totalorder %v848, %v1346
    %vm1348 = vmand %vm1344, %vm1347
    %vm1349 = vmand %vm1345, %vm1347
    %v1350 = vmul.f32 %v1327, 2.0
    %v1351 = vmul.f32 %v1329, 2.0
    %v1352 = vsub.f32 %v1350, 1.0
    %v1353 = vsub.f32 %v1351, 1.0
    %v1354 = vsel %vm1348, %v1352, -1e+09
    %v1355 = vsel %vm1349, %v1353, -1e+09
    %s1356 = scalar_lea.vmem %s13, 48
    %1357 = vst [vmem:[%s1356] sm:$0xff] %v1354
    %1358 = vst [vmem:[%s1356 + $0x8] sm:$0xff] %v1355
    %v1359 = vsel %vm1348, %v991, 0.0
    %v1360 = vsel %vm1349, %v992, 0.0
    %s1361 = scalar_lea.vmem %s14, 48
    %1362 = vst [vmem:[%s1361] sm:$0xff] %v1359
    %1363 = vst [vmem:[%s1361 + $0x8] sm:$0xff] %v1360
    %s1364 = scalar_lea.smem [#allocation8], 129
    %1365 = sst [smem:[%s1364]] %s1302
    // Predicated region
    $region66: #{fcos_loss_forward.1} parent=1 // pred_check
      _
    $region67: #{fcos_loss_forward.1} parent=1 // pred_check_branch
      %1367 = sbr.rel (0) target = $region69
    $region68: #{fcos_loss_forward.1} parent=1 // pred_region
      _
    $region69: #{fcos_loss_forward.1} parent=1 // pred_fallthru
      _
    // Predicated region
    $region70: #{fcos_loss_forward.1} parent=1 // pred_check
      _
    $region71: #{fcos_loss_forward.1} parent=1 // pred_check_branch
      %1369 = sbr.rel (0) target = $region73
    $region72: #{fcos_loss_forward.1} parent=1 // pred_region
      _
    $region73: #{fcos_loss_forward.1} parent=1 // pred_fallthru
      _
    // Predicated region
    $region74: #{fcos_loss_forward.1} parent=1 // pred_check
      _
    $region75: #{fcos_loss_forward.1} parent=1 // pred_check_branch
      %1371 = sbr.rel (0) target = $region77
    $region76: #{fcos_loss_forward.1} parent=1 // pred_region
      %s1373 = ssub.s32 32, 32
      %1374 = vsyncadd [#allocation4], %s1373
      %s1376 = sshll.u32 %s15, 4
      %s1377 = int_to_ptr.vmem [resolvable:$true] %s1376
      %1379 = dma.smem_to_vmem [#allocation8], 32, %s1377, [#allocation4]
    $region77: #{fcos_loss_forward.1} parent=1 // pred_fallthru
      _
    // Predicated region
    $region78: #{fcos_loss_forward.1} parent=1 // pred_check
      _
    $region79: #{fcos_loss_forward.1} parent=1 // pred_check_branch
      %1381 = sbr.rel (0) target = $region81
    $region80: #{fcos_loss_forward.1} parent=1 // pred_region
      %s1383 = ssub.s32 16, 16
      %1384 = vsyncadd [#allocation10], %s1383
      %s1386 = sshll.u32 %s16, 4
      %s1387 = int_to_ptr.vmem [resolvable:$true] %s1386
      %1389 = dma.smem_to_vmem [#allocation9], 16, %s1387, [#allocation10]
    $region81: #{fcos_loss_forward.1} parent=1 // pred_fallthru
      _
    // Predicated region
    $region82: #{fcos_loss_forward.1} parent=1 // pred_check
      _
    $region83: #{fcos_loss_forward.1} parent=1 // pred_check_branch
      %1391 = sbr.rel (0) target = $region85
    $region84: #{fcos_loss_forward.1} parent=1 // pred_region
      _
    $region85: #{fcos_loss_forward.1} parent=1 // pred_fallthru
      _
    // Predicated region
    $region86: #{fcos_loss_forward.1} parent=1 // pred_check
      _
    $region87: #{fcos_loss_forward.1} parent=1 // pred_check_branch
      %1393 = sbr.rel (0) target = $region89
    $region88: #{fcos_loss_forward.1} parent=1 // pred_region
      _
    $region89: #{fcos_loss_forward.1} parent=1 // pred_fallthru
      _
    // Predicated region
    $region90: #{fcos_loss_forward.1} parent=1 // pred_check
      _
    $region91: #{fcos_loss_forward.1} parent=1 // pred_check_branch
      %1395 = sbr.rel (0) target = $region93
    $region92: #{fcos_loss_forward.1} parent=1 // pred_region
      %1396 = dma.done [#allocation4], 32
    $region93: #{fcos_loss_forward.1} parent=1 // pred_fallthru
      _
    // Predicated region
    $region94: #{fcos_loss_forward.1} parent=1 // pred_check
      _
    $region95: #{fcos_loss_forward.1} parent=1 // pred_check_branch
      %1398 = sbr.rel (0) target = $region97
    $region96: #{fcos_loss_forward.1} parent=1 // pred_region
      %1399 = dma.done [#allocation10], 16
    $region97: #{fcos_loss_forward.1} parent=1 // pred_fallthru
      _
    %1400 = sfence
    %1401 = vsyncpa [#allocation3], 1
    %1402 = vsyncpa [#allocation6], 1
    %1403 = vsyncpa [#allocation4], 1
    %1404 = vsyncpa [#allocation10], 1

</llo_original>
